<compile_context>
chip_gen: v6e
topology: v6e:2x2x1
jax: 0.10.0
libtpu: 0.0.40
codegen_flags: <defaults>
</compile_context>

<pallas_src>
import math

import jax
import jax.numpy as jnp
from jax.experimental import pallas as pl
from jax.experimental.pallas import tpu as pltpu

# ---- small, self-consistent ALBERT config ----
B = 2           # batch
S = 8           # sequence length
H = 32          # hidden_size
NH = 4          # num_attention_heads
D = H // NH     # head dim
I = 64          # intermediate_size
EPS = 1e-12     # layer_norm_eps
T = B * S       # folded token rows
LANES = 128     # padded lane width for the fused QKV weight / bias slab

# rows of the packed (8, 128) bias / LayerNorm slab
ROW_QKV, ROW_BO, ROW_AG, ROW_AB, ROW_B1, ROW_B2, ROW_FG, ROW_FB = range(8)


def _layer_norm(x, g, b):
    mu = jnp.mean(x, axis=-1, keepdims=True)
    xc = x - mu                                       # center once, reuse
    var = jnp.mean(xc * xc, axis=-1, keepdims=True)
    return xc * jax.lax.rsqrt(var + EPS) * g + b


def _new_gelu(x):
    c = math.sqrt(2.0 / math.pi)
    return 0.5 * x * (1.0 + jnp.tanh(c * (x + 0.044715 * x * x * x)))


def albert_layer_kernel(
    x_ref,          # (T, H)
    wqkv_ref,       # (H, 128)  [Wq | Wk | Wv | 0-pad]
    wo_ref,         # (H, H)
    w1_ref,         # (H, I)
    w2_ref,         # (I, H)
    bias_ref,       # (8, 128)  packed biases / LN params
    out_ref,        # (T, H)
    probs_ref,      # (B, NH, S, S)
):
    x = x_ref[...]                                                    # (T, H)
    bias = bias_ref[...]                                              # (8, 128)

    # ---- fused Q/K/V projection: one lane-dense MXU matmul + one bias row ----
    qkv = jnp.dot(x, wqkv_ref[...],
                  preferred_element_type=jnp.float32) + bias[ROW_QKV:ROW_QKV + 1, :]
    q = qkv[:, 0:H] * (1.0 / math.sqrt(D))            # fold softmax scale once into q
    k = qkv[:, H:2 * H]
    v = qkv[:, 2 * H:3 * H]

    # Split folded token axis back into (B, S, .) so attention stays block-diagonal
    # over the batch (tile-aligned sublane split: 16 -> 2x8).
    q3 = q.reshape(B, S, H)
    k3 = k.reshape(B, S, H)
    v3 = v.reshape(B, S, H)
    wo = wo_ref[...]

    proj = jnp.zeros((T, H), jnp.float32)
    p_heads = []
    for h in range(NH):                                # static unroll over heads
        sl = slice(h * D, (h + 1) * D)
        qh = q3[:, :, sl]                                              # (B, S, D)
        kh = k3[:, :, sl]
        vh = v3[:, :, sl]
        s_h = jnp.einsum('bqd,bkd->bqk', qh, kh,
                         preferred_element_type=jnp.float32)           # (B, S, S)
        s_h = s_h - jnp.max(s_h, axis=-1, keepdims=True)
        e = jnp.exp(s_h)
        p_h = e / jnp.sum(e, axis=-1, keepdims=True)   # exact softmax (probs sum to 1)
        p_heads.append(p_h)
        ctx_h = jnp.einsum('bqk,bkd->bqd', p_h, vh,
                           preferred_element_type=jnp.float32)          # (B, S, D)
        # Fold this head straight through its slice of Wo (MXU accumulation):
        # ctx @ Wo == sum_h ctx_h @ Wo[h*D:(h+1)*D, :]
        proj = proj + jnp.dot(ctx_h.reshape(T, D), wo[sl, :],
                              preferred_element_type=jnp.float32)

    # single store of all attention probabilities
    probs_ref[...] = jnp.stack(p_heads, axis=1)                         # (B, NH, S, S)

    # output projection bias + residual + attention LayerNorm
    attn_out = _layer_norm(x + proj + bias[ROW_BO:ROW_BO + 1, :H],
                           bias[ROW_AG:ROW_AG + 1, :H],
                           bias[ROW_AB:ROW_AB + 1, :H])

    # ---- ff_chunk: Linear -> NewGELU -> Linear ----
    ffn = jnp.dot(attn_out, w1_ref[...],
                  preferred_element_type=jnp.float32) + bias[ROW_B1:ROW_B1 + 1, :I]
    ffn = _new_gelu(ffn)
    ffn = jnp.dot(ffn, w2_ref[...],
                  preferred_element_type=jnp.float32) + bias[ROW_B2:ROW_B2 + 1, :H]

    # ---- full_layer_layer_norm(ffn_output + attention_output) ----
    out_ref[...] = _layer_norm(ffn + attn_out,
                               bias[ROW_FG:ROW_FG + 1, :H],
                               bias[ROW_FB:ROW_FB + 1, :H])


def albert_layer(x, params):
    (wq, bq, wk, bk, wv, bv, wo, bo, ag, ab, w1, b1, w2, b2, fg, fb) = params

    x2 = x.reshape(T, H)                               # fold batch rows: one invocation

    # Fused, zero-padded QKV weight: (H, 128) = [Wq | Wk | Wv | 0].
    wqkv = jnp.zeros((H, LANES), jnp.float32)
    wqkv = wqkv.at[:, :3 * H].set(jnp.concatenate([wq, wk, wv], axis=1))

    # All small per-feature parameters packed into one (8, 128) slab (one vreg).
    slab = jnp.zeros((8, LANES), jnp.float32)
    slab = slab.at[ROW_QKV, :3 * H].set(jnp.concatenate([bq, bk, bv]))
    slab = slab.at[ROW_BO, :H].set(bo)
    slab = slab.at[ROW_AG, :H].set(ag)
    slab = slab.at[ROW_AB, :H].set(ab)
    slab = slab.at[ROW_B1, :I].set(b1)
    slab = slab.at[ROW_B2, :H].set(b2)
    slab = slab.at[ROW_FG, :H].set(fg)
    slab = slab.at[ROW_FB, :H].set(fb)

    vmem = pl.BlockSpec(memory_space=pltpu.MemorySpace.VMEM)
    out2, probs = pl.pallas_call(
        albert_layer_kernel,
        out_shape=(
            jax.ShapeDtypeStruct((T, H), jnp.float32),
            jax.ShapeDtypeStruct((B, NH, S, S), jnp.float32),
        ),
        in_specs=[vmem] * 6,
        out_specs=(vmem, vmem),
    )(x2, wqkv, wo, w1, w2, slab)
    return out2.reshape(B, S, H), probs


def reference(x, params):
    (wq, bq, wk, bk, wv, bv, wo, bo, ag, ab, w1, b1, w2, b2, fg, fb) = params
    q = x @ wq + bq
    k = x @ wk + bk
    v = x @ wv + bv
    qh = q.reshape(B, S, NH, D).transpose(0, 2, 1, 3)
    kh = k.reshape(B, S, NH, D).transpose(0, 2, 1, 3)
    vh = v.reshape(B, S, NH, D).transpose(0, 2, 1, 3)
    scores = jnp.einsum("bhqd,bhkd->bhqk", qh, kh) / math.sqrt(D)
    p = jax.nn.softmax(scores, axis=-1)
    ctx = jnp.einsum("bhqk,bhkd->bhqd", p, vh).transpose(0, 2, 1, 3).reshape(B, S, H)
    attn_out = _layer_norm(x + ctx @ wo + bo, ag, ab)
    ffn = _new_gelu(attn_out @ w1 + b1) @ w2 + b2
    return _layer_norm(ffn + attn_out, fg, fb), p


def init_params(key):
    ks = jax.random.split(key, 8)

    def lin(k, din, dout):
        kw, kb = jax.random.split(k)
        return (0.02 * jax.random.normal(kw, (din, dout), jnp.float32),
                0.02 * jax.random.normal(kb, (dout,), jnp.float32))

    wq, bq = lin(ks[0], H, H)
    wk, bk = lin(ks[1], H, H)
    wv, bv = lin(ks[2], H, H)
    wo, bo = lin(ks[3], H, H)
    ag, ab = jnp.ones((H,), jnp.float32), jnp.zeros((H,), jnp.float32)
    w1, b1 = lin(ks[4], H, I)
    w2, b2 = lin(ks[5], I, H)
    fg, fb = jnp.ones((H,), jnp.float32), jnp.zeros((H,), jnp.float32)
    return (wq, bq, wk, bk, wv, bv, wo, bo, ag, ab, w1, b1, w2, b2, fg, fb)


if __name__ == "__main__":
    key = jax.random.PRNGKey(0)
    kx, kp = jax.random.split(key)
    x = jax.random.normal(kx, (B, S, H), jnp.float32)
    params = init_params(kp)

    out, probs = jax.jit(albert_layer)(x, params)
    out = jax.block_until_ready(out)
    probs = jax.block_until_ready(probs)

    ref_out, ref_probs = reference(x, params)
    # softmax is now exact; remaining deltas are MXU-vs-XLA matmul rounding only
    assert jnp.allclose(out, ref_out, atol=2e-3, rtol=2e-3)
    assert jnp.allclose(probs, ref_probs, atol=2e-3, rtol=2e-3)

    print("KERNEL_OK")
</pallas_src>

<mosaic_0001>
module attributes {stable_mosaic.version = 11 : i64} {
  func.func @albert_layer_kernel(%arg0: memref<16x32xf32, #tpu.memory_space<vmem>>, %arg1: memref<32x128xf32, #tpu.memory_space<vmem>>, %arg2: memref<32x32xf32, #tpu.memory_space<vmem>>, %arg3: memref<32x64xf32, #tpu.memory_space<vmem>>, %arg4: memref<64x32xf32, #tpu.memory_space<vmem>>, %arg5: memref<8x128xf32, #tpu.memory_space<vmem>>, %arg6: memref<16x32xf32, #tpu.memory_space<vmem>>, %arg7: memref<2x4x8x8xf32, #tpu.memory_space<vmem>>) attributes {dimension_semantics = [], scalar_prefetch = 0 : i64, scratch_operands = 0 : i64, tpu.core_type = #tpu.core_type<tc>} {
    %c0 = arith.constant 0 : index
    %c0_0 = arith.constant 0 : index
    %0 = vector.load %arg0[%c0, %c0_0] : memref<16x32xf32, #tpu.memory_space<vmem>>, vector<16x32xf32>
    %c0_1 = arith.constant 0 : index
    %c0_2 = arith.constant 0 : index
    %1 = vector.load %arg5[%c0_1, %c0_2] : memref<8x128xf32, #tpu.memory_space<vmem>>, vector<8x128xf32>
    %c0_3 = arith.constant 0 : index
    %c0_4 = arith.constant 0 : index
    %2 = vector.load %arg1[%c0_3, %c0_4] : memref<32x128xf32, #tpu.memory_space<vmem>>, vector<32x128xf32>
    %cst = arith.constant dense<0.000000e+00> : vector<16x128xf32>
    %3 = tpu.matmul %0, %2, %cst {dimension_numbers = #tpu.dot_dimension_numbers<[1], [0], [0], [1], [0, 0, 1, 1], [], []>} : vector<16x32xf32>, vector<32x128xf32>, vector<16x128xf32> -> vector<16x128xf32>
    %4 = vector.extract_strided_slice %1 {offsets = [0, 0], sizes = [1, 128], strides = [1, 1]} : vector<8x128xf32> to vector<1x128xf32>
    %5 = vector.broadcast %4 : vector<1x128xf32> to vector<16x128xf32>
    %6 = arith.addf %3, %5 : vector<16x128xf32>
    %7 = vector.extract_strided_slice %6 {offsets = [0, 0], sizes = [16, 32], strides = [1, 1]} : vector<16x128xf32> to vector<16x32xf32>
    %cst_5 = arith.constant 0.353553385 : f32
    %8 = vector.broadcast %cst_5 : f32 to vector<16x32xf32>
    %9 = arith.mulf %7, %8 : vector<16x32xf32>
    %10 = vector.extract_strided_slice %6 {offsets = [0, 32], sizes = [16, 32], strides = [1, 1]} : vector<16x128xf32> to vector<16x32xf32>
    %11 = vector.extract_strided_slice %6 {offsets = [0, 64], sizes = [16, 32], strides = [1, 1]} : vector<16x128xf32> to vector<16x32xf32>
    %12 = vector.shape_cast %9 : vector<16x32xf32> to vector<2x8x32xf32>
    %13 = vector.shape_cast %10 : vector<16x32xf32> to vector<2x8x32xf32>
    %14 = vector.shape_cast %11 : vector<16x32xf32> to vector<2x8x32xf32>
    %c0_6 = arith.constant 0 : index
    %c0_7 = arith.constant 0 : index
    %15 = vector.load %arg2[%c0_6, %c0_7] : memref<32x32xf32, #tpu.memory_space<vmem>>, vector<32x32xf32>
    %cst_8 = arith.constant 0.000000e+00 : f32
    %16 = vector.broadcast %cst_8 : f32 to vector<16x32xf32>
    %17 = vector.extract_strided_slice %12 {offsets = [0, 0, 0], sizes = [2, 8, 8], strides = [1, 1, 1]} : vector<2x8x32xf32> to vector<2x8x8xf32>
    %18 = vector.extract_strided_slice %13 {offsets = [0, 0, 0], sizes = [2, 8, 8], strides = [1, 1, 1]} : vector<2x8x32xf32> to vector<2x8x8xf32>
    %19 = vector.extract_strided_slice %14 {offsets = [0, 0, 0], sizes = [2, 8, 8], strides = [1, 1, 1]} : vector<2x8x32xf32> to vector<2x8x8xf32>
    "tpu.trace_start"() <{level = 10 : i32, message = "bqd,bkd->bqk"}> : () -> ()
    %cst_9 = arith.constant dense<0.000000e+00> : vector<2x8x8xf32>
    %20 = tpu.matmul %17, %18, %cst_9 {dimension_numbers = #tpu.dot_dimension_numbers<[2], [2], [1], [1], [0, 0, 0, 1, 1, 1], [0], [0]>} : vector<2x8x8xf32>, vector<2x8x8xf32>, vector<2x8x8xf32> -> vector<2x8x8xf32>
    "tpu.trace_stop"() : () -> ()
    %cst_10 = arith.constant dense<0xFF800000> : vector<2x8xf32>
    %21 = vector.multi_reduction <maximumf>, %20, %cst_10 [2] : vector<2x8x8xf32> to vector<2x8xf32>
    %22 = vector.shape_cast %21 : vector<2x8xf32> to vector<2x8x1xf32>
    %23 = vector.broadcast %22 : vector<2x8x1xf32> to vector<2x8x8xf32>
    %24 = arith.subf %20, %23 : vector<2x8x8xf32>
    %25 = math.exp %24 : vector<2x8x8xf32>
    %cst_11 = arith.constant dense<0.000000e+00> : vector<2x8xf32>
    %26 = vector.multi_reduction <add>, %25, %cst_11 [2] : vector<2x8x8xf32> to vector<2x8xf32>
    %27 = vector.shape_cast %26 : vector<2x8xf32> to vector<2x8x1xf32>
    %28 = vector.broadcast %27 : vector<2x8x1xf32> to vector<2x8x8xf32>
    %29 = arith.divf %25, %28 : vector<2x8x8xf32>
    "tpu.trace_start"() <{level = 10 : i32, message = "bqk,bkd->bqd"}> : () -> ()
    %cst_12 = arith.constant dense<0.000000e+00> : vector<2x8x8xf32>
    %30 = tpu.matmul %29, %19, %cst_12 {dimension_numbers = #tpu.dot_dimension_numbers<[2], [1], [1], [2], [0, 0, 0, 1, 1, 2], [0], [0]>} : vector<2x8x8xf32>, vector<2x8x8xf32>, vector<2x8x8xf32> -> vector<2x8x8xf32>
    "tpu.trace_stop"() : () -> ()
    %31 = vector.shape_cast %30 : vector<2x8x8xf32> to vector<16x8xf32>
    %32 = vector.extract_strided_slice %15 {offsets = [0, 0], sizes = [8, 32], strides = [1, 1]} : vector<32x32xf32> to vector<8x32xf32>
    %cst_13 = arith.constant dense<0.000000e+00> : vector<16x32xf32>
    %33 = tpu.matmul %31, %32, %cst_13 {dimension_numbers = #tpu.dot_dimension_numbers<[1], [0], [0], [1], [0, 0, 1, 1], [], []>} : vector<16x8xf32>, vector<8x32xf32>, vector<16x32xf32> -> vector<16x32xf32>
    %34 = arith.addf %16, %33 : vector<16x32xf32>
    %35 = vector.extract_strided_slice %12 {offsets = [0, 0, 8], sizes = [2, 8, 8], strides = [1, 1, 1]} : vector<2x8x32xf32> to vector<2x8x8xf32>
    %36 = vector.extract_strided_slice %13 {offsets = [0, 0, 8], sizes = [2, 8, 8], strides = [1, 1, 1]} : vector<2x8x32xf32> to vector<2x8x8xf32>
    %37 = vector.extract_strided_slice %14 {offsets = [0, 0, 8], sizes = [2, 8, 8], strides = [1, 1, 1]} : vector<2x8x32xf32> to vector<2x8x8xf32>
    "tpu.trace_start"() <{level = 10 : i32, message = "bqd,bkd->bqk"}> : () -> ()
    %cst_14 = arith.constant dense<0.000000e+00> : vector<2x8x8xf32>
    %38 = tpu.matmul %35, %36, %cst_14 {dimension_numbers = #tpu.dot_dimension_numbers<[2], [2], [1], [1], [0, 0, 0, 1, 1, 1], [0], [0]>} : vector<2x8x8xf32>, vector<2x8x8xf32>, vector<2x8x8xf32> -> vector<2x8x8xf32>
    "tpu.trace_stop"() : () -> ()
    %cst_15 = arith.constant dense<0xFF800000> : vector<2x8xf32>
    %39 = vector.multi_reduction <maximumf>, %38, %cst_15 [2] : vector<2x8x8xf32> to vector<2x8xf32>
    %40 = vector.shape_cast %39 : vector<2x8xf32> to vector<2x8x1xf32>
    %41 = vector.broadcast %40 : vector<2x8x1xf32> to vector<2x8x8xf32>
    %42 = arith.subf %38, %41 : vector<2x8x8xf32>
    %43 = math.exp %42 : vector<2x8x8xf32>
    %cst_16 = arith.constant dense<0.000000e+00> : vector<2x8xf32>
    %44 = vector.multi_reduction <add>, %43, %cst_16 [2] : vector<2x8x8xf32> to vector<2x8xf32>
    %45 = vector.shape_cast %44 : vector<2x8xf32> to vector<2x8x1xf32>
    %46 = vector.broadcast %45 : vector<2x8x1xf32> to vector<2x8x8xf32>
    %47 = arith.divf %43, %46 : vector<2x8x8xf32>
    "tpu.trace_start"() <{level = 10 : i32, message = "bqk,bkd->bqd"}> : () -> ()
    %cst_17 = arith.constant dense<0.000000e+00> : vector<2x8x8xf32>
    %48 = tpu.matmul %47, %37, %cst_17 {dimension_numbers = #tpu.dot_dimension_numbers<[2], [1], [1], [2], [0, 0, 0, 1, 1, 2], [0], [0]>} : vector<2x8x8xf32>, vector<2x8x8xf32>, vector<2x8x8xf32> -> vector<2x8x8xf32>
    "tpu.trace_stop"() : () -> ()
    %49 = vector.shape_cast %48 : vector<2x8x8xf32> to vector<16x8xf32>
    %50 = vector.extract_strided_slice %15 {offsets = [8, 0], sizes = [8, 32], strides = [1, 1]} : vector<32x32xf32> to vector<8x32xf32>
    %cst_18 = arith.constant dense<0.000000e+00> : vector<16x32xf32>
    %51 = tpu.matmul %49, %50, %cst_18 {dimension_numbers = #tpu.dot_dimension_numbers<[1], [0], [0], [1], [0, 0, 1, 1], [], []>} : vector<16x8xf32>, vector<8x32xf32>, vector<16x32xf32> -> vector<16x32xf32>
    %52 = arith.addf %34, %51 : vector<16x32xf32>
    %53 = vector.extract_strided_slice %12 {offsets = [0, 0, 16], sizes = [2, 8, 8], strides = [1, 1, 1]} : vector<2x8x32xf32> to vector<2x8x8xf32>
    %54 = vector.extract_strided_slice %13 {offsets = [0, 0, 16], sizes = [2, 8, 8], strides = [1, 1, 1]} : vector<2x8x32xf32> to vector<2x8x8xf32>
    %55 = vector.extract_strided_slice %14 {offsets = [0, 0, 16], sizes = [2, 8, 8], strides = [1, 1, 1]} : vector<2x8x32xf32> to vector<2x8x8xf32>
    "tpu.trace_start"() <{level = 10 : i32, message = "bqd,bkd->bqk"}> : () -> ()
    %cst_19 = arith.constant dense<0.000000e+00> : vector<2x8x8xf32>
    %56 = tpu.matmul %53, %54, %cst_19 {dimension_numbers = #tpu.dot_dimension_numbers<[2], [2], [1], [1], [0, 0, 0, 1, 1, 1], [0], [0]>} : vector<2x8x8xf32>, vector<2x8x8xf32>, vector<2x8x8xf32> -> vector<2x8x8xf32>
    "tpu.trace_stop"() : () -> ()
    %cst_20 = arith.constant dense<0xFF800000> : vector<2x8xf32>
    %57 = vector.multi_reduction <maximumf>, %56, %cst_20 [2] : vector<2x8x8xf32> to vector<2x8xf32>
    %58 = vector.shape_cast %57 : vector<2x8xf32> to vector<2x8x1xf32>
    %59 = vector.broadcast %58 : vector<2x8x1xf32> to vector<2x8x8xf32>
    %60 = arith.subf %56, %59 : vector<2x8x8xf32>
    %61 = math.exp %60 : vector<2x8x8xf32>
    %cst_21 = arith.constant dense<0.000000e+00> : vector<2x8xf32>
    %62 = vector.multi_reduction <add>, %61, %cst_21 [2] : vector<2x8x8xf32> to vector<2x8xf32>
    %63 = vector.shape_cast %62 : vector<2x8xf32> to vector<2x8x1xf32>
    %64 = vector.broadcast %63 : vector<2x8x1xf32> to vector<2x8x8xf32>
    %65 = arith.divf %61, %64 : vector<2x8x8xf32>
    "tpu.trace_start"() <{level = 10 : i32, message = "bqk,bkd->bqd"}> : () -> ()
    %cst_22 = arith.constant dense<0.000000e+00> : vector<2x8x8xf32>
    %66 = tpu.matmul %65, %55, %cst_22 {dimension_numbers = #tpu.dot_dimension_numbers<[2], [1], [1], [2], [0, 0, 0, 1, 1, 2], [0], [0]>} : vector<2x8x8xf32>, vector<2x8x8xf32>, vector<2x8x8xf32> -> vector<2x8x8xf32>
    "tpu.trace_stop"() : () -> ()
    %67 = vector.shape_cast %66 : vector<2x8x8xf32> to vector<16x8xf32>
    %68 = vector.extract_strided_slice %15 {offsets = [16, 0], sizes = [8, 32], strides = [1, 1]} : vector<32x32xf32> to vector<8x32xf32>
    %cst_23 = arith.constant dense<0.000000e+00> : vector<16x32xf32>
    %69 = tpu.matmul %67, %68, %cst_23 {dimension_numbers = #tpu.dot_dimension_numbers<[1], [0], [0], [1], [0, 0, 1, 1], [], []>} : vector<16x8xf32>, vector<8x32xf32>, vector<16x32xf32> -> vector<16x32xf32>
    %70 = arith.addf %52, %69 : vector<16x32xf32>
    %71 = vector.extract_strided_slice %12 {offsets = [0, 0, 24], sizes = [2, 8, 8], strides = [1, 1, 1]} : vector<2x8x32xf32> to vector<2x8x8xf32>
    %72 = vector.extract_strided_slice %13 {offsets = [0, 0, 24], sizes = [2, 8, 8], strides = [1, 1, 1]} : vector<2x8x32xf32> to vector<2x8x8xf32>
    %73 = vector.extract_strided_slice %14 {offsets = [0, 0, 24], sizes = [2, 8, 8], strides = [1, 1, 1]} : vector<2x8x32xf32> to vector<2x8x8xf32>
    "tpu.trace_start"() <{level = 10 : i32, message = "bqd,bkd->bqk"}> : () -> ()
    %cst_24 = arith.constant dense<0.000000e+00> : vector<2x8x8xf32>
    %74 = tpu.matmul %71, %72, %cst_24 {dimension_numbers = #tpu.dot_dimension_numbers<[2], [2], [1], [1], [0, 0, 0, 1, 1, 1], [0], [0]>} : vector<2x8x8xf32>, vector<2x8x8xf32>, vector<2x8x8xf32> -> vector<2x8x8xf32>
    "tpu.trace_stop"() : () -> ()
    %cst_25 = arith.constant dense<0xFF800000> : vector<2x8xf32>
    %75 = vector.multi_reduction <maximumf>, %74, %cst_25 [2] : vector<2x8x8xf32> to vector<2x8xf32>
    %76 = vector.shape_cast %75 : vector<2x8xf32> to vector<2x8x1xf32>
    %77 = vector.broadcast %76 : vector<2x8x1xf32> to vector<2x8x8xf32>
    %78 = arith.subf %74, %77 : vector<2x8x8xf32>
    %79 = math.exp %78 : vector<2x8x8xf32>
    %cst_26 = arith.constant dense<0.000000e+00> : vector<2x8xf32>
    %80 = vector.multi_reduction <add>, %79, %cst_26 [2] : vector<2x8x8xf32> to vector<2x8xf32>
    %81 = vector.shape_cast %80 : vector<2x8xf32> to vector<2x8x1xf32>
    %82 = vector.broadcast %81 : vector<2x8x1xf32> to vector<2x8x8xf32>
    %83 = arith.divf %79, %82 : vector<2x8x8xf32>
    "tpu.trace_start"() <{level = 10 : i32, message = "bqk,bkd->bqd"}> : () -> ()
    %cst_27 = arith.constant dense<0.000000e+00> : vector<2x8x8xf32>
    %84 = tpu.matmul %83, %73, %cst_27 {dimension_numbers = #tpu.dot_dimension_numbers<[2], [1], [1], [2], [0, 0, 0, 1, 1, 2], [0], [0]>} : vector<2x8x8xf32>, vector<2x8x8xf32>, vector<2x8x8xf32> -> vector<2x8x8xf32>
    "tpu.trace_stop"() : () -> ()
    %85 = vector.shape_cast %84 : vector<2x8x8xf32> to vector<16x8xf32>
    %86 = vector.extract_strided_slice %15 {offsets = [24, 0], sizes = [8, 32], strides = [1, 1]} : vector<32x32xf32> to vector<8x32xf32>
    %cst_28 = arith.constant dense<0.000000e+00> : vector<16x32xf32>
    %87 = tpu.matmul %85, %86, %cst_28 {dimension_numbers = #tpu.dot_dimension_numbers<[1], [0], [0], [1], [0, 0, 1, 1], [], []>} : vector<16x8xf32>, vector<8x32xf32>, vector<16x32xf32> -> vector<16x32xf32>
    %88 = arith.addf %70, %87 : vector<16x32xf32>
    %89 = vector.shape_cast %29 : vector<2x8x8xf32> to vector<2x1x8x8xf32>
    %90 = vector.shape_cast %47 : vector<2x8x8xf32> to vector<2x1x8x8xf32>
    %91 = vector.shape_cast %65 : vector<2x8x8xf32> to vector<2x1x8x8xf32>
    %92 = vector.shape_cast %83 : vector<2x8x8xf32> to vector<2x1x8x8xf32>
    %93 = tpu.concatenate %89, %90, %91, %92 in 1 : vector<2x1x8x8xf32>, vector<2x1x8x8xf32>, vector<2x1x8x8xf32>, vector<2x1x8x8xf32> -> vector<2x4x8x8xf32>
    %c0_29 = arith.constant 0 : index
    %c0_30 = arith.constant 0 : index
    %c0_31 = arith.constant 0 : index
    %c0_32 = arith.constant 0 : index
    %94 = vector.load %arg7[%c0_29, %c0_30, %c0_31, %c0_32] : memref<2x4x8x8xf32, #tpu.memory_space<vmem>>, vector<2x4x8x8xf32>
    tpu.vector_store %arg7[%c0_29, %c0_30, %c0_31, %c0_32], %93 {strides = array<i32>} : memref<2x4x8x8xf32, #tpu.memory_space<vmem>>, vector<2x4x8x8xf32>,
    %95 = arith.addf %0, %88 : vector<16x32xf32>
    %96 = vector.extract_strided_slice %1 {offsets = [1, 0], sizes = [1, 32], strides = [1, 1]} : vector<8x128xf32> to vector<1x32xf32>
    %97 = vector.broadcast %96 : vector<1x32xf32> to vector<16x32xf32>
    %98 = arith.addf %95, %97 : vector<16x32xf32>
    %99 = vector.extract_strided_slice %1 {offsets = [2, 0], sizes = [1, 32], strides = [1, 1]} : vector<8x128xf32> to vector<1x32xf32>
    %100 = vector.extract_strided_slice %1 {offsets = [3, 0], sizes = [1, 32], strides = [1, 1]} : vector<8x128xf32> to vector<1x32xf32>
    %cst_33 = arith.constant dense<0.000000e+00> : vector<16xf32>
    %101 = vector.multi_reduction <add>, %98, %cst_33 [1] : vector<16x32xf32> to vector<16xf32>
    %102 = vector.shape_cast %101 : vector<16xf32> to vector<16x1xf32>
    %cst_34 = arith.constant 3.200000e+01 : f32
    %103 = vector.broadcast %cst_34 : f32 to vector<16x1xf32>
    %104 = arith.divf %102, %103 : vector<16x1xf32>
    %105 = vector.broadcast %104 : vector<16x1xf32> to vector<16x32xf32>
    %106 = arith.subf %98, %105 : vector<16x32xf32>
    %107 = arith.mulf %106, %106 : vector<16x32xf32>
    %cst_35 = arith.constant dense<0.000000e+00> : vector<16xf32>
    %108 = vector.multi_reduction <add>, %107, %cst_35 [1] : vector<16x32xf32> to vector<16xf32>
    %109 = vector.shape_cast %108 : vector<16xf32> to vector<16x1xf32>
    %cst_36 = arith.constant 3.200000e+01 : f32
    %110 = vector.broadcast %cst_36 : f32 to vector<16x1xf32>
    %111 = arith.divf %109, %110 : vector<16x1xf32>
    %cst_37 = arith.constant 9.99999996E-13 : f32
    %112 = vector.broadcast %cst_37 : f32 to vector<16x1xf32>
    %113 = arith.addf %111, %112 : vector<16x1xf32>
    %114 = math.rsqrt %113 : vector<16x1xf32>
    %115 = vector.broadcast %114 : vector<16x1xf32> to vector<16x32xf32>
    %116 = arith.mulf %106, %115 : vector<16x32xf32>
    %117 = vector.broadcast %99 : vector<1x32xf32> to vector<16x32xf32>
    %118 = arith.mulf %116, %117 : vector<16x32xf32>
    %119 = vector.broadcast %100 : vector<1x32xf32> to vector<16x32xf32>
    %120 = arith.addf %118, %119 : vector<16x32xf32>
    %c0_38 = arith.constant 0 : index
    %c0_39 = arith.constant 0 : index
    %121 = vector.load %arg3[%c0_38, %c0_39] : memref<32x64xf32, #tpu.memory_space<vmem>>, vector<32x64xf32>
    %cst_40 = arith.constant dense<0.000000e+00> : vector<16x64xf32>
    %122 = tpu.matmul %120, %121, %cst_40 {dimension_numbers = #tpu.dot_dimension_numbers<[1], [0], [0], [1], [0, 0, 1, 1], [], []>} : vector<16x32xf32>, vector<32x64xf32>, vector<16x64xf32> -> vector<16x64xf32>
    %123 = vector.extract_strided_slice %1 {offsets = [4, 0], sizes = [1, 64], strides = [1, 1]} : vector<8x128xf32> to vector<1x64xf32>
    %124 = vector.broadcast %123 : vector<1x64xf32> to vector<16x64xf32>
    %125 = arith.addf %122, %124 : vector<16x64xf32>
    %cst_41 = arith.constant 5.000000e-01 : f32
    %126 = vector.broadcast %cst_41 : f32 to vector<16x64xf32>
    %127 = arith.mulf %126, %125 : vector<16x64xf32>
    %cst_42 = arith.constant 4.471500e-02 : f32
    %128 = vector.broadcast %cst_42 : f32 to vector<16x64xf32>
    %129 = arith.mulf %128, %125 : vector<16x64xf32>
    %130 = arith.mulf %129, %125 : vector<16x64xf32>
    %131 = arith.mulf %130, %125 : vector<16x64xf32>
    %132 = arith.addf %125, %131 : vector<16x64xf32>
    %cst_43 = arith.constant 0.797884583 : f32
    %133 = vector.broadcast %cst_43 : f32 to vector<16x64xf32>
    %134 = arith.mulf %133, %132 : vector<16x64xf32>
    %135 = math.tanh %134 : vector<16x64xf32>
    %cst_44 = arith.constant 1.000000e+00 : f32
    %136 = vector.broadcast %cst_44 : f32 to vector<16x64xf32>
    %137 = arith.addf %136, %135 : vector<16x64xf32>
    %138 = arith.mulf %127, %137 : vector<16x64xf32>
    %c0_45 = arith.constant 0 : index
    %c0_46 = arith.constant 0 : index
    %139 = vector.load %arg4[%c0_45, %c0_46] : memref<64x32xf32, #tpu.memory_space<vmem>>, vector<64x32xf32>
    %cst_47 = arith.constant dense<0.000000e+00> : vector<16x32xf32>
    %140 = tpu.matmul %138, %139, %cst_47 {dimension_numbers = #tpu.dot_dimension_numbers<[1], [0], [0], [1], [0, 0, 1, 1], [], []>} : vector<16x64xf32>, vector<64x32xf32>, vector<16x32xf32> -> vector<16x32xf32>
    %141 = vector.extract_strided_slice %1 {offsets = [5, 0], sizes = [1, 32], strides = [1, 1]} : vector<8x128xf32> to vector<1x32xf32>
    %142 = vector.broadcast %141 : vector<1x32xf32> to vector<16x32xf32>
    %143 = arith.addf %140, %142 : vector<16x32xf32>
    %144 = arith.addf %143, %120 : vector<16x32xf32>
    %145 = vector.extract_strided_slice %1 {offsets = [6, 0], sizes = [1, 32], strides = [1, 1]} : vector<8x128xf32> to vector<1x32xf32>
    %146 = vector.extract_strided_slice %1 {offsets = [7, 0], sizes = [1, 32], strides = [1, 1]} : vector<8x128xf32> to vector<1x32xf32>
    %cst_48 = arith.constant dense<0.000000e+00> : vector<16xf32>
    %147 = vector.multi_reduction <add>, %144, %cst_48 [1] : vector<16x32xf32> to vector<16xf32>
    %148 = vector.shape_cast %147 : vector<16xf32> to vector<16x1xf32>
    %cst_49 = arith.constant 3.200000e+01 : f32
    %149 = vector.broadcast %cst_49 : f32 to vector<16x1xf32>
    %150 = arith.divf %148, %149 : vector<16x1xf32>
    %151 = vector.broadcast %150 : vector<16x1xf32> to vector<16x32xf32>
    %152 = arith.subf %144, %151 : vector<16x32xf32>
    %153 = arith.mulf %152, %152 : vector<16x32xf32>
    %cst_50 = arith.constant dense<0.000000e+00> : vector<16xf32>
    %154 = vector.multi_reduction <add>, %153, %cst_50 [1] : vector<16x32xf32> to vector<16xf32>
    %155 = vector.shape_cast %154 : vector<16xf32> to vector<16x1xf32>
    %cst_51 = arith.constant 3.200000e+01 : f32
    %156 = vector.broadcast %cst_51 : f32 to vector<16x1xf32>
    %157 = arith.divf %155, %156 : vector<16x1xf32>
    %cst_52 = arith.constant 9.99999996E-13 : f32
    %158 = vector.broadcast %cst_52 : f32 to vector<16x1xf32>
    %159 = arith.addf %157, %158 : vector<16x1xf32>
    %160 = math.rsqrt %159 : vector<16x1xf32>
    %161 = vector.broadcast %160 : vector<16x1xf32> to vector<16x32xf32>
    %162 = arith.mulf %152, %161 : vector<16x32xf32>
    %163 = vector.broadcast %145 : vector<1x32xf32> to vector<16x32xf32>
    %164 = arith.mulf %162, %163 : vector<16x32xf32>
    %165 = vector.broadcast %146 : vector<1x32xf32> to vector<16x32xf32>
    %166 = arith.addf %164, %165 : vector<16x32xf32>
    %c0_53 = arith.constant 0 : index
    %c0_54 = arith.constant 0 : index
    %167 = vector.load %arg6[%c0_53, %c0_54] : memref<16x32xf32, #tpu.memory_space<vmem>>, vector<16x32xf32>
    tpu.vector_store %arg6[%c0_53, %c0_54], %166 {strides = array<i32>} : memref<16x32xf32, #tpu.memory_space<vmem>>, vector<16x32xf32>,
    return
  }
}

</mosaic_0001>

<llo_original>
// kernel: albert_layer.1
$region0: #{albert_layer.1}
  #allocation0 [shape = 'u32[]', space=smem, size = 0x4, offset = 0x4, fixed_abs, tag = 'smem constant byte address 0x4 - core index']
  #allocation1 [shape = 'u32[144,128]{1,0:T(1,128)}', space=vmem, size = 0x12000, scoped, tag = 'internal scratch']
  %s0 = inlined_call_operand.vmem [shape: f32[16,32], index: 0, kind: input, shape index: {}]
  %s1 = inlined_call_operand.vmem [shape: f32[32,128], index: 1, kind: input, shape index: {}]
  %s2 = inlined_call_operand.vmem [shape: f32[32,32], index: 2, kind: input, shape index: {}]
  %s3 = inlined_call_operand.vmem [shape: f32[32,64], index: 3, kind: input, shape index: {}]
  %s4 = inlined_call_operand.vmem [shape: f32[64,32], index: 4, kind: input, shape index: {}]
  %s5 = inlined_call_operand.vmem [shape: f32[8,128], index: 5, kind: input, shape index: {}]
  %s6 = inlined_call_operand.hbm [shape: f32[16,32], index: 6, kind: output, shape index: {0}]
  %s7 = inlined_call_operand.hbm [shape: f32[2,4,8,8], index: 7, kind: output, shape index: {1}]
  %8 = xla_tuple %s6, %s7
  %s9 = sld [smem:[#allocation0]]
  $region42: #{albert_layer.1} parent=0
    _
  %s11 = ssub.s32 1, %s9
  %s12 = scalar_select 0, %s11, %s9
  $region1: #{albert_layer.1} parent=0
    #allocation2 [shape = 'u8[8192]{0}', space=vmem, size = 0x2000, scoped, tag = 'output window, operand 0, single buffered']
    #allocation3 [shape = 's32[1]{0}', space=sflag, size = 0x4, scoped, tag = 'scoped memory for albert_layer.1']
    #allocation4 [shape = 'u8[32768]{0}', space=vmem, size = 0x8000, scoped, tag = 'output window, operand 1, single buffered']
    #allocation5 [shape = 's32[1]{0}', space=sflag, size = 0x4, scoped, tag = 'scoped memory for albert_layer.1']
    %13 = vsyncpa [#allocation3], 0
    %14 = vsyncpa [#allocation5], 0
    // Predicated region
    $region2: #{albert_layer.1} parent=1 // pred_check
      _
    $region3: #{albert_layer.1} parent=1 // pred_check_branch
      %16 = sbr.rel (0) target = $region5
    $region4: #{albert_layer.1} parent=1 // pred_region
      _
    $region5: #{albert_layer.1} parent=1 // pred_fallthru
      _
    // Predicated region
    $region6: #{albert_layer.1} parent=1 // pred_check
      _
    $region7: #{albert_layer.1} parent=1 // pred_check_branch
      %18 = sbr.rel (0) target = $region9
    $region8: #{albert_layer.1} parent=1 // pred_region
      _
    $region9: #{albert_layer.1} parent=1 // pred_fallthru
      _
    // Predicated region
    $region10: #{albert_layer.1} parent=1 // pred_check
      _
    $region11: #{albert_layer.1} parent=1 // pred_check_branch
      %20 = sbr.rel (0) target = $region13
    $region12: #{albert_layer.1} parent=1 // pred_region
      _
    $region13: #{albert_layer.1} parent=1 // pred_fallthru
      _
    // Predicated region
    $region14: #{albert_layer.1} parent=1 // pred_check
      _
    $region15: #{albert_layer.1} parent=1 // pred_check_branch
      %22 = sbr.rel (0) target = $region17
    $region16: #{albert_layer.1} parent=1 // pred_region
      _
    $region17: #{albert_layer.1} parent=1 // pred_fallthru
      _
    // Predicated region
    $region18: #{albert_layer.1} parent=1 // pred_check
      _
    $region19: #{albert_layer.1} parent=1 // pred_check_branch
      %24 = sbr.rel (0) target = $region21
    $region20: #{albert_layer.1} parent=1 // pred_region
      _
    $region21: #{albert_layer.1} parent=1 // pred_fallthru
      _
    // Predicated region
    $region22: #{albert_layer.1} parent=1 // pred_check
      _
    $region23: #{albert_layer.1} parent=1 // pred_check_branch
      %26 = sbr.rel (0) target = $region25
    $region24: #{albert_layer.1} parent=1 // pred_region
      _
    $region25: #{albert_layer.1} parent=1 // pred_fallthru
      _
    %v27 = vld [vmem:[%s0] sm:$0xff]
    %v28 = vld [vmem:[%s0 + $0x8] sm:$0xff]
    %v29 = vld [vmem:[%s5] sm:$0xff]
    %v30 = vld [vmem:[%s1] sm:$0xff]
    %v31 = vld [vmem:[%s1 + $0x8] sm:$0xff]
    %v32 = vld [vmem:[%s1 + $0x10] sm:$0xff]
    %v33 = vld [vmem:[%s1 + $0x18] sm:$0xff]
    %v34 = vlaneseq
    %v35 = vshrl.u32 %v34, 7
    %v36 = vsub.s32 0, %v35
    %v37 = vrot.slane %v29, %v36
    %vm38 = vcmask 261120
    %v40 = vsel %vm38, %v27, 0
    %v43 = vsel %vm38, %v28, 0
    %45 = vmatprep.subr.mxu0 0.0
    %46 = vmatpush1.msra.mxu0 0.0
    %47 = vmatprep.subr.mxu0 0.0
    %48 = vmatpush1.msra.mxu0 0.0
    %49 = vmatprep.subr.mxu0 0.0
    %50 = vmatpush1.msra.mxu0 0.0
    %51 = vmatprep.subr.mxu0 0.0
    %52 = vmatpush1.msra.mxu0 0.0
    %53 = vmatprep.subr.mxu0 0.0
    %54 = vmatpush1.msra.mxu0 0.0
    %55 = vmatprep.subr.mxu0 0.0
    %56 = vmatpush1.msra.mxu0 0.0
    %57 = vmatprep.subr.mxu0 0.0
    %58 = vmatpush1.msra.mxu0 0.0
    %59 = vmatprep.subr.mxu0 0.0
    %60 = vmatpush1.msra.mxu0 0.0
    %61 = vmatprep.subr.mxu0 0.0
    %62 = vmatpush1.msra.mxu0 0.0
    %63 = vmatprep.subr.mxu0 0.0
    %64 = vmatpush1.msra.mxu0 0.0
    %65 = vmatprep.subr.mxu0 0.0
    %66 = vmatpush1.msra.mxu0 0.0
    %67 = vmatprep.subr.mxu0 0.0
    %68 = vmatpush1.msra.mxu0 0.0
    %69 = vmatprep.subr.mxu0 0.0
    %70 = vmatpush1.msra.mxu0 %v33
    %71 = vmatprep.subr.mxu0 0.0
    %72 = vmatpush1.msra.mxu0 %v32
    %73 = vmatprep.subr.mxu0 0.0
    %74 = vmatpush1.msra.mxu0 %v31
    %75 = vmatprep.subr.mxu0 0.0
    %76 = vmatpush1.msra.mxu0 %v30
    %77 = vmatprep.subr.mxu0 0.0
    %78 = vmatpush2.msra.mxu0 0.0
    %79 = vmatprep.subr.mxu0 0.0
    %80 = vmatpush2.msra.mxu0 0.0
    %81 = vmatprep.subr.mxu0 0.0
    %82 = vmatpush2.msra.mxu0 0.0
    %83 = vmatprep.subr.mxu0 0.0
    %84 = vmatpush2.msra.mxu0 0.0
    %85 = vmatprep.subr.mxu0 0.0
    %86 = vmatpush2.msra.mxu0 0.0
    %87 = vmatprep.subr.mxu0 0.0
    %88 = vmatpush2.msra.mxu0 0.0
    %89 = vmatprep.subr.mxu0 0.0
    %90 = vmatpush2.msra.mxu0 0.0
    %91 = vmatprep.subr.mxu0 0.0
    %92 = vmatpush2.msra.mxu0 0.0
    %93 = vmatprep.subr.mxu0 0.0
    %94 = vmatpush2.msra.mxu0 0.0
    %95 = vmatprep.subr.mxu0 0.0
    %96 = vmatpush2.msra.mxu0 0.0
    %97 = vmatprep.subr.mxu0 0.0
    %98 = vmatpush2.msra.mxu0 0.0
    %99 = vmatprep.subr.mxu0 0.0
    %100 = vmatpush2.msra.mxu0 0.0
    %101 = vmatprep.subr.mxu0 0.0
    %102 = vmatpush2.msra.mxu0 0.0
    %103 = vmatprep.subr.mxu0 0.0
    %104 = vmatpush2.msra.mxu0 0.0
    %105 = vmatprep.subr.mxu0 0.0
    %106 = vmatpush2.msra.mxu0 0.0
    %107 = vmatprep.subr.mxu0 0.0
    %108 = vmatpush2.msra.mxu0 0.0
    %109 = vmatprep.mubr.f32.mxu0 0.0
    %110 = vmatmul.mubr.f32.gmra.mxu0 %v40
    %v111 = vpop.f32.mrf.mxu0
    %v112 = vadd.f32 %v37, %v111
    %v113 = vpop.f32.mrf.mxu0
    %114 = vmatprep.mubr.f32.mxu0 0.0
    %115 = vmatmul.mubr.f32.gmra.mxu0 %v43
    %v116 = vpop.f32.mrf.mxu0
    %v117 = vadd.f32 %v37, %v116
    %v118 = vpop.f32.mrf.mxu0
    %119 = vdwg.mxu0
    %v120 = vmul.f32 %v112, 0.35355338
    %v121 = vmul.f32 %v117, 0.35355338
    %v122 = vld [vmem:[%s2] sm:$0xff]
    %v123 = vld [vmem:[%s2 + $0x8] sm:$0xff]
    %v124 = vld [vmem:[%s2 + $0x10] sm:$0xff]
    %v125 = vld [vmem:[%s2 + $0x18] sm:$0xff]
    %127 = vrot.lane.b32.xlu0 %v112, 96
    %v128 = vpop.permute.xlu0 %127
    %vm129 = vcmask 64512
    %v131 = vsel %vm129, %v120, 0
    %v133 = vsel %vm129, %v128, 0
    %135 = vmatprep.subr.mxu0 0.0
    %136 = vmatpush1.xpose.msra.mxu0 0.0
    %137 = vmatprep.subr.mxu0 0.0
    %138 = vmatpush1.xpose.msra.mxu0 0.0
    %139 = vmatprep.subr.mxu0 0.0
    %140 = vmatpush1.xpose.msra.mxu0 0.0
    %141 = vmatprep.subr.mxu0 0.0
    %142 = vmatpush1.xpose.msra.mxu0 0.0
    %143 = vmatprep.subr.mxu0 0.0
    %144 = vmatpush1.xpose.msra.mxu0 0.0
    %145 = vmatprep.subr.mxu0 0.0
    %146 = vmatpush1.xpose.msra.mxu0 0.0
    %147 = vmatprep.subr.mxu0 0.0
    %148 = vmatpush1.xpose.msra.mxu0 0.0
    %149 = vmatprep.subr.mxu0 0.0
    %150 = vmatpush1.xpose.msra.mxu0 0.0
    %151 = vmatprep.subr.mxu0 0.0
    %152 = vmatpush1.xpose.msra.mxu0 0.0
    %153 = vmatprep.subr.mxu0 0.0
    %154 = vmatpush1.xpose.msra.mxu0 0.0
    %155 = vmatprep.subr.mxu0 0.0
    %156 = vmatpush1.xpose.msra.mxu0 0.0
    %157 = vmatprep.subr.mxu0 0.0
    %158 = vmatpush1.xpose.msra.mxu0 0.0
    %159 = vmatprep.subr.mxu0 0.0
    %160 = vmatpush1.xpose.msra.mxu0 0.0
    %161 = vmatprep.subr.mxu0 0.0
    %162 = vmatpush1.xpose.msra.mxu0 0.0
    %163 = vmatprep.subr.mxu0 0.0
    %164 = vmatpush1.xpose.msra.mxu0 0.0
    %165 = vmatprep.subr.mxu0 0.0
    %166 = vmatpush1.xpose.msra.mxu0 %v133
    %167 = vmatprep.subr.mxu0 0.0
    %168 = vmatpush2.xpose.msra.mxu0 0.0
    %169 = vmatprep.subr.mxu0 0.0
    %170 = vmatpush2.xpose.msra.mxu0 0.0
    %171 = vmatprep.subr.mxu0 0.0
    %172 = vmatpush2.xpose.msra.mxu0 0.0
    %173 = vmatprep.subr.mxu0 0.0
    %174 = vmatpush2.xpose.msra.mxu0 0.0
    %175 = vmatprep.subr.mxu0 0.0
    %176 = vmatpush2.xpose.msra.mxu0 0.0
    %177 = vmatprep.subr.mxu0 0.0
    %178 = vmatpush2.xpose.msra.mxu0 0.0
    %179 = vmatprep.subr.mxu0 0.0
    %180 = vmatpush2.xpose.msra.mxu0 0.0
    %181 = vmatprep.subr.mxu0 0.0
    %182 = vmatpush2.xpose.msra.mxu0 0.0
    %183 = vmatprep.subr.mxu0 0.0
    %184 = vmatpush2.xpose.msra.mxu0 0.0
    %185 = vmatprep.subr.mxu0 0.0
    %186 = vmatpush2.xpose.msra.mxu0 0.0
    %187 = vmatprep.subr.mxu0 0.0
    %188 = vmatpush2.xpose.msra.mxu0 0.0
    %189 = vmatprep.subr.mxu0 0.0
    %190 = vmatpush2.xpose.msra.mxu0 0.0
    %191 = vmatprep.subr.mxu0 0.0
    %192 = vmatpush2.xpose.msra.mxu0 0.0
    %193 = vmatprep.subr.mxu0 0.0
    %194 = vmatpush2.xpose.msra.mxu0 0.0
    %195 = vmatprep.subr.mxu0 0.0
    %196 = vmatpush2.xpose.msra.mxu0 0.0
    %197 = vmatprep.subr.mxu0 0.0
    %198 = vmatpush2.xpose.msra.mxu0 0.0
    %199 = vmatprep.mubr.f32.mxu0 0.0
    %200 = vmatmul.mubr.f32.gmra.mxu0 %v131
    %v201 = vpop.f32.mrf.mxu0
    %v202 = vadd.f32 0.0, %v201
    %v203 = vpop.f32.mrf.mxu0
    %204 = vdwg.mxu0
    %206 = vrot.lane.b32.xlu0 %v117, 96
    %v207 = vpop.permute.xlu0 %206
    %v209 = vsel %vm129, %v121, 0
    %v211 = vsel %vm129, %v207, 0
    %213 = vmatprep.subr.mxu0 0.0
    %214 = vmatpush1.xpose.msra.mxu0 0.0
    %215 = vmatprep.subr.mxu0 0.0
    %216 = vmatpush1.xpose.msra.mxu0 0.0
    %217 = vmatprep.subr.mxu0 0.0
    %218 = vmatpush1.xpose.msra.mxu0 0.0
    %219 = vmatprep.subr.mxu0 0.0
    %220 = vmatpush1.xpose.msra.mxu0 0.0
    %221 = vmatprep.subr.mxu0 0.0
    %222 = vmatpush1.xpose.msra.mxu0 0.0
    %223 = vmatprep.subr.mxu0 0.0
    %224 = vmatpush1.xpose.msra.mxu0 0.0
    %225 = vmatprep.subr.mxu0 0.0
    %226 = vmatpush1.xpose.msra.mxu0 0.0
    %227 = vmatprep.subr.mxu0 0.0
    %228 = vmatpush1.xpose.msra.mxu0 0.0
    %229 = vmatprep.subr.mxu0 0.0
    %230 = vmatpush1.xpose.msra.mxu0 0.0
    %231 = vmatprep.subr.mxu0 0.0
    %232 = vmatpush1.xpose.msra.mxu0 0.0
    %233 = vmatprep.subr.mxu0 0.0
    %234 = vmatpush1.xpose.msra.mxu0 0.0
    %235 = vmatprep.subr.mxu0 0.0
    %236 = vmatpush1.xpose.msra.mxu0 0.0
    %237 = vmatprep.subr.mxu0 0.0
    %238 = vmatpush1.xpose.msra.mxu0 0.0
    %239 = vmatprep.subr.mxu0 0.0
    %240 = vmatpush1.xpose.msra.mxu0 0.0
    %241 = vmatprep.subr.mxu0 0.0
    %242 = vmatpush1.xpose.msra.mxu0 0.0
    %243 = vmatprep.subr.mxu0 0.0
    %244 = vmatpush1.xpose.msra.mxu0 %v211
    %245 = vmatprep.subr.mxu0 0.0
    %246 = vmatpush2.xpose.msra.mxu0 0.0
    %247 = vmatprep.subr.mxu0 0.0
    %248 = vmatpush2.xpose.msra.mxu0 0.0
    %249 = vmatprep.subr.mxu0 0.0
    %250 = vmatpush2.xpose.msra.mxu0 0.0
    %251 = vmatprep.subr.mxu0 0.0
    %252 = vmatpush2.xpose.msra.mxu0 0.0
    %253 = vmatprep.subr.mxu0 0.0
    %254 = vmatpush2.xpose.msra.mxu0 0.0
    %255 = vmatprep.subr.mxu0 0.0
    %256 = vmatpush2.xpose.msra.mxu0 0.0
    %257 = vmatprep.subr.mxu0 0.0
    %258 = vmatpush2.xpose.msra.mxu0 0.0
    %259 = vmatprep.subr.mxu0 0.0
    %260 = vmatpush2.xpose.msra.mxu0 0.0
    %261 = vmatprep.subr.mxu0 0.0
    %262 = vmatpush2.xpose.msra.mxu0 0.0
    %263 = vmatprep.subr.mxu0 0.0
    %264 = vmatpush2.xpose.msra.mxu0 0.0
    %265 = vmatprep.subr.mxu0 0.0
    %266 = vmatpush2.xpose.msra.mxu0 0.0
    %267 = vmatprep.subr.mxu0 0.0
    %268 = vmatpush2.xpose.msra.mxu0 0.0
    %269 = vmatprep.subr.mxu0 0.0
    %270 = vmatpush2.xpose.msra.mxu0 0.0
    %271 = vmatprep.subr.mxu0 0.0
    %272 = vmatpush2.xpose.msra.mxu0 0.0
    %273 = vmatprep.subr.mxu0 0.0
    %274 = vmatpush2.xpose.msra.mxu0 0.0
    %275 = vmatprep.subr.mxu0 0.0
    %276 = vmatpush2.xpose.msra.mxu0 0.0
    %277 = vmatprep.mubr.f32.mxu0 0.0
    %278 = vmatmul.mubr.f32.gmra.mxu0 %v209
    %v279 = vpop.f32.mrf.mxu0
    %v280 = vadd.f32 0.0, %v279
    %v281 = vpop.f32.mrf.mxu0
    %282 = vdwg.mxu0
    %v283 = vsel %vm129, %v202, -inf
    %284 = vmax.xlane.f32.xlu0 %v283
    %v285 = vpop.xlane.xlu0 %284
    %v286 = vsel %vm129, %v280, -inf
    %287 = vmax.xlane.f32.xlu0 %v286
    %v288 = vpop.xlane.xlu0 %287
    %v289 = vsub.f32 %v202, %v285
    %v290 = vsub.f32 %v280, %v288
    %v291 = vmul.f32 %v289, 1.442695
    %v292 = vpow.pop %v291
    %v293 = vmul.f32 %v290, 1.442695
    %v294 = vpow.pop %v293
    %v295 = vsel %vm129, %v292, 0.0
    %296 = vadd.xlane.f32.xlu0 %v295
    %v297 = vpop.xlane.xlu0 %296
    %v298 = vsel %vm129, %v294, 0.0
    %299 = vadd.xlane.f32.xlu0 %v298
    %v300 = vpop.xlane.xlu0 %299
    %v301 = vrcp.pop %v297
    %v302 = vmul.f32 %v292, %v301
    %v303 = vrcp.pop %v300
    %v304 = vmul.f32 %v294, %v303
    %305 = vrot.lane.b32.xlu0 %v112, 64
    %v306 = vpop.permute.xlu0 %305
    %v309 = vsel %vm129, %v302, 0
    %311 = vmatprep.subr.mxu0 0.0
    %312 = vmatpush1.msra.mxu0 0.0
    %313 = vmatprep.subr.mxu0 0.0
    %314 = vmatpush1.msra.mxu0 0.0
    %315 = vmatprep.subr.mxu0 0.0
    %316 = vmatpush1.msra.mxu0 0.0
    %317 = vmatprep.subr.mxu0 0.0
    %318 = vmatpush1.msra.mxu0 0.0
    %319 = vmatprep.subr.mxu0 0.0
    %320 = vmatpush1.msra.mxu0 0.0
    %321 = vmatprep.subr.mxu0 0.0
    %322 = vmatpush1.msra.mxu0 0.0
    %323 = vmatprep.subr.mxu0 0.0
    %324 = vmatpush1.msra.mxu0 0.0
    %325 = vmatprep.subr.mxu0 0.0
    %326 = vmatpush1.msra.mxu0 0.0
    %327 = vmatprep.subr.mxu0 0.0
    %328 = vmatpush1.msra.mxu0 0.0
    %329 = vmatprep.subr.mxu0 0.0
    %330 = vmatpush1.msra.mxu0 0.0
    %331 = vmatprep.subr.mxu0 0.0
    %332 = vmatpush1.msra.mxu0 0.0
    %333 = vmatprep.subr.mxu0 0.0
    %334 = vmatpush1.msra.mxu0 0.0
    %335 = vmatprep.subr.mxu0 0.0
    %336 = vmatpush1.msra.mxu0 0.0
    %337 = vmatprep.subr.mxu0 0.0
    %338 = vmatpush1.msra.mxu0 0.0
    %339 = vmatprep.subr.mxu0 0.0
    %340 = vmatpush1.msra.mxu0 0.0
    %341 = vmatprep.subr.mxu0 0.0
    %342 = vmatpush1.msra.mxu0 %v306
    %343 = vmatprep.subr.mxu0 0.0
    %344 = vmatpush2.msra.mxu0 0.0
    %345 = vmatprep.subr.mxu0 0.0
    %346 = vmatpush2.msra.mxu0 0.0
    %347 = vmatprep.subr.mxu0 0.0
    %348 = vmatpush2.msra.mxu0 0.0
    %349 = vmatprep.subr.mxu0 0.0
    %350 = vmatpush2.msra.mxu0 0.0
    %351 = vmatprep.subr.mxu0 0.0
    %352 = vmatpush2.msra.mxu0 0.0
    %353 = vmatprep.subr.mxu0 0.0
    %354 = vmatpush2.msra.mxu0 0.0
    %355 = vmatprep.subr.mxu0 0.0
    %356 = vmatpush2.msra.mxu0 0.0
    %357 = vmatprep.subr.mxu0 0.0
    %358 = vmatpush2.msra.mxu0 0.0
    %359 = vmatprep.subr.mxu0 0.0
    %360 = vmatpush2.msra.mxu0 0.0
    %361 = vmatprep.subr.mxu0 0.0
    %362 = vmatpush2.msra.mxu0 0.0
    %363 = vmatprep.subr.mxu0 0.0
    %364 = vmatpush2.msra.mxu0 0.0
    %365 = vmatprep.subr.mxu0 0.0
    %366 = vmatpush2.msra.mxu0 0.0
    %367 = vmatprep.subr.mxu0 0.0
    %368 = vmatpush2.msra.mxu0 0.0
    %369 = vmatprep.subr.mxu0 0.0
    %370 = vmatpush2.msra.mxu0 0.0
    %371 = vmatprep.subr.mxu0 0.0
    %372 = vmatpush2.msra.mxu0 0.0
    %373 = vmatprep.subr.mxu0 0.0
    %374 = vmatpush2.msra.mxu0 0.0
    %375 = vmatprep.mubr.f32.mxu0 0.0
    %376 = vmatmul.mubr.f32.gmra.mxu0 %v309
    %v377 = vpop.f32.mrf.mxu0
    %v378 = vadd.f32 0.0, %v377
    %v379 = vpop.f32.mrf.mxu0
    %380 = vdwg.mxu0
    %381 = vrot.lane.b32.xlu0 %v117, 64
    %v382 = vpop.permute.xlu0 %381
    %v385 = vsel %vm129, %v304, 0
    %387 = vmatprep.subr.mxu0 0.0
    %388 = vmatpush1.msra.mxu0 0.0
    %389 = vmatprep.subr.mxu0 0.0
    %390 = vmatpush1.msra.mxu0 0.0
    %391 = vmatprep.subr.mxu0 0.0
    %392 = vmatpush1.msra.mxu0 0.0
    %393 = vmatprep.subr.mxu0 0.0
    %394 = vmatpush1.msra.mxu0 0.0
    %395 = vmatprep.subr.mxu0 0.0
    %396 = vmatpush1.msra.mxu0 0.0
    %397 = vmatprep.subr.mxu0 0.0
    %398 = vmatpush1.msra.mxu0 0.0
    %399 = vmatprep.subr.mxu0 0.0
    %400 = vmatpush1.msra.mxu0 0.0
    %401 = vmatprep.subr.mxu0 0.0
    %402 = vmatpush1.msra.mxu0 0.0
    %403 = vmatprep.subr.mxu0 0.0
    %404 = vmatpush1.msra.mxu0 0.0
    %405 = vmatprep.subr.mxu0 0.0
    %406 = vmatpush1.msra.mxu0 0.0
    %407 = vmatprep.subr.mxu0 0.0
    %408 = vmatpush1.msra.mxu0 0.0
    %409 = vmatprep.subr.mxu0 0.0
    %410 = vmatpush1.msra.mxu0 0.0
    %411 = vmatprep.subr.mxu0 0.0
    %412 = vmatpush1.msra.mxu0 0.0
    %413 = vmatprep.subr.mxu0 0.0
    %414 = vmatpush1.msra.mxu0 0.0
    %415 = vmatprep.subr.mxu0 0.0
    %416 = vmatpush1.msra.mxu0 0.0
    %417 = vmatprep.subr.mxu0 0.0
    %418 = vmatpush1.msra.mxu0 %v382
    %419 = vmatprep.subr.mxu0 0.0
    %420 = vmatpush2.msra.mxu0 0.0
    %421 = vmatprep.subr.mxu0 0.0
    %422 = vmatpush2.msra.mxu0 0.0
    %423 = vmatprep.subr.mxu0 0.0
    %424 = vmatpush2.msra.mxu0 0.0
    %425 = vmatprep.subr.mxu0 0.0
    %426 = vmatpush2.msra.mxu0 0.0
    %427 = vmatprep.subr.mxu0 0.0
    %428 = vmatpush2.msra.mxu0 0.0
    %429 = vmatprep.subr.mxu0 0.0
    %430 = vmatpush2.msra.mxu0 0.0
    %431 = vmatprep.subr.mxu0 0.0
    %432 = vmatpush2.msra.mxu0 0.0
    %433 = vmatprep.subr.mxu0 0.0
    %434 = vmatpush2.msra.mxu0 0.0
    %435 = vmatprep.subr.mxu0 0.0
    %436 = vmatpush2.msra.mxu0 0.0
    %437 = vmatprep.subr.mxu0 0.0
    %438 = vmatpush2.msra.mxu0 0.0
    %439 = vmatprep.subr.mxu0 0.0
    %440 = vmatpush2.msra.mxu0 0.0
    %441 = vmatprep.subr.mxu0 0.0
    %442 = vmatpush2.msra.mxu0 0.0
    %443 = vmatprep.subr.mxu0 0.0
    %444 = vmatpush2.msra.mxu0 0.0
    %445 = vmatprep.subr.mxu0 0.0
    %446 = vmatpush2.msra.mxu0 0.0
    %447 = vmatprep.subr.mxu0 0.0
    %448 = vmatpush2.msra.mxu0 0.0
    %449 = vmatprep.subr.mxu0 0.0
    %450 = vmatpush2.msra.mxu0 0.0
    %451 = vmatprep.mubr.f32.mxu0 0.0
    %452 = vmatmul.mubr.f32.gmra.mxu0 %v385
    %v453 = vpop.f32.mrf.mxu0
    %v454 = vadd.f32 0.0, %v453
    %v455 = vpop.f32.mrf.mxu0
    %456 = vdwg.mxu0
    %457 = vrot.lane.b32.xlu0 %v120, 120
    %v458 = vpop.permute.xlu0 %457
    %459 = vrot.lane.b32.xlu0 %v112, 88
    %v460 = vpop.permute.xlu0 %459
    %v461 = vsel %vm129, %v458, 0
    %v463 = vsel %vm129, %v460, 0
    %465 = vmatprep.subr.mxu0 0.0
    %466 = vmatpush1.xpose.msra.mxu0 0.0
    %467 = vmatprep.subr.mxu0 0.0
    %468 = vmatpush1.xpose.msra.mxu0 0.0
    %469 = vmatprep.subr.mxu0 0.0
    %470 = vmatpush1.xpose.msra.mxu0 0.0
    %471 = vmatprep.subr.mxu0 0.0
    %472 = vmatpush1.xpose.msra.mxu0 0.0
    %473 = vmatprep.subr.mxu0 0.0
    %474 = vmatpush1.xpose.msra.mxu0 0.0
    %475 = vmatprep.subr.mxu0 0.0
    %476 = vmatpush1.xpose.msra.mxu0 0.0
    %477 = vmatprep.subr.mxu0 0.0
    %478 = vmatpush1.xpose.msra.mxu0 0.0
    %479 = vmatprep.subr.mxu0 0.0
    %480 = vmatpush1.xpose.msra.mxu0 0.0
    %481 = vmatprep.subr.mxu0 0.0
    %482 = vmatpush1.xpose.msra.mxu0 0.0
    %483 = vmatprep.subr.mxu0 0.0
    %484 = vmatpush1.xpose.msra.mxu0 0.0
    %485 = vmatprep.subr.mxu0 0.0
    %486 = vmatpush1.xpose.msra.mxu0 0.0
    %487 = vmatprep.subr.mxu0 0.0
    %488 = vmatpush1.xpose.msra.mxu0 0.0
    %489 = vmatprep.subr.mxu0 0.0
    %490 = vmatpush1.xpose.msra.mxu0 0.0
    %491 = vmatprep.subr.mxu0 0.0
    %492 = vmatpush1.xpose.msra.mxu0 0.0
    %493 = vmatprep.subr.mxu0 0.0
    %494 = vmatpush1.xpose.msra.mxu0 0.0
    %495 = vmatprep.subr.mxu0 0.0
    %496 = vmatpush1.xpose.msra.mxu0 %v463
    %497 = vmatprep.subr.mxu0 0.0
    %498 = vmatpush2.xpose.msra.mxu0 0.0
    %499 = vmatprep.subr.mxu0 0.0
    %500 = vmatpush2.xpose.msra.mxu0 0.0
    %501 = vmatprep.subr.mxu0 0.0
    %502 = vmatpush2.xpose.msra.mxu0 0.0
    %503 = vmatprep.subr.mxu0 0.0
    %504 = vmatpush2.xpose.msra.mxu0 0.0
    %505 = vmatprep.subr.mxu0 0.0
    %506 = vmatpush2.xpose.msra.mxu0 0.0
    %507 = vmatprep.subr.mxu0 0.0
    %508 = vmatpush2.xpose.msra.mxu0 0.0
    %509 = vmatprep.subr.mxu0 0.0
    %510 = vmatpush2.xpose.msra.mxu0 0.0
    %511 = vmatprep.subr.mxu0 0.0
    %512 = vmatpush2.xpose.msra.mxu0 0.0
    %513 = vmatprep.subr.mxu0 0.0
    %514 = vmatpush2.xpose.msra.mxu0 0.0
    %515 = vmatprep.subr.mxu0 0.0
    %516 = vmatpush2.xpose.msra.mxu0 0.0
    %517 = vmatprep.subr.mxu0 0.0
    %518 = vmatpush2.xpose.msra.mxu0 0.0
    %519 = vmatprep.subr.mxu0 0.0
    %520 = vmatpush2.xpose.msra.mxu0 0.0
    %521 = vmatprep.subr.mxu0 0.0
    %522 = vmatpush2.xpose.msra.mxu0 0.0
    %523 = vmatprep.subr.mxu0 0.0
    %524 = vmatpush2.xpose.msra.mxu0 0.0
    %525 = vmatprep.subr.mxu0 0.0
    %526 = vmatpush2.xpose.msra.mxu0 0.0
    %527 = vmatprep.subr.mxu0 0.0
    %528 = vmatpush2.xpose.msra.mxu0 0.0
    %529 = vmatprep.mubr.f32.mxu0 0.0
    %530 = vmatmul.mubr.f32.gmra.mxu0 %v461
    %v531 = vpop.f32.mrf.mxu0
    %v532 = vadd.f32 0.0, %v531
    %v533 = vpop.f32.mrf.mxu0
    %534 = vdwg.mxu0
    %535 = vrot.lane.b32.xlu0 %v121, 120
    %v536 = vpop.permute.xlu0 %535
    %537 = vrot.lane.b32.xlu0 %v117, 88
    %v538 = vpop.permute.xlu0 %537
    %v539 = vsel %vm129, %v536, 0
    %v541 = vsel %vm129, %v538, 0
    %543 = vmatprep.subr.mxu0 0.0
    %544 = vmatpush1.xpose.msra.mxu0 0.0
    %545 = vmatprep.subr.mxu0 0.0
    %546 = vmatpush1.xpose.msra.mxu0 0.0
    %547 = vmatprep.subr.mxu0 0.0
    %548 = vmatpush1.xpose.msra.mxu0 0.0
    %549 = vmatprep.subr.mxu0 0.0
    %550 = vmatpush1.xpose.msra.mxu0 0.0
    %551 = vmatprep.subr.mxu0 0.0
    %552 = vmatpush1.xpose.msra.mxu0 0.0
    %553 = vmatprep.subr.mxu0 0.0
    %554 = vmatpush1.xpose.msra.mxu0 0.0
    %555 = vmatprep.subr.mxu0 0.0
    %556 = vmatpush1.xpose.msra.mxu0 0.0
    %557 = vmatprep.subr.mxu0 0.0
    %558 = vmatpush1.xpose.msra.mxu0 0.0
    %559 = vmatprep.subr.mxu0 0.0
    %560 = vmatpush1.xpose.msra.mxu0 0.0
    %561 = vmatprep.subr.mxu0 0.0
    %562 = vmatpush1.xpose.msra.mxu0 0.0
    %563 = vmatprep.subr.mxu0 0.0
    %564 = vmatpush1.xpose.msra.mxu0 0.0
    %565 = vmatprep.subr.mxu0 0.0
    %566 = vmatpush1.xpose.msra.mxu0 0.0
    %567 = vmatprep.subr.mxu0 0.0
    %568 = vmatpush1.xpose.msra.mxu0 0.0
    %569 = vmatprep.subr.mxu0 0.0
    %570 = vmatpush1.xpose.msra.mxu0 0.0
    %571 = vmatprep.subr.mxu0 0.0
    %572 = vmatpush1.xpose.msra.mxu0 0.0
    %573 = vmatprep.subr.mxu0 0.0
    %574 = vmatpush1.xpose.msra.mxu0 %v541
    %575 = vmatprep.subr.mxu0 0.0
    %576 = vmatpush2.xpose.msra.mxu0 0.0
    %577 = vmatprep.subr.mxu0 0.0
    %578 = vmatpush2.xpose.msra.mxu0 0.0
    %579 = vmatprep.subr.mxu0 0.0
    %580 = vmatpush2.xpose.msra.mxu0 0.0
    %581 = vmatprep.subr.mxu0 0.0
    %582 = vmatpush2.xpose.msra.mxu0 0.0
    %583 = vmatprep.subr.mxu0 0.0
    %584 = vmatpush2.xpose.msra.mxu0 0.0
    %585 = vmatprep.subr.mxu0 0.0
    %586 = vmatpush2.xpose.msra.mxu0 0.0
    %587 = vmatprep.subr.mxu0 0.0
    %588 = vmatpush2.xpose.msra.mxu0 0.0
    %589 = vmatprep.subr.mxu0 0.0
    %590 = vmatpush2.xpose.msra.mxu0 0.0
    %591 = vmatprep.subr.mxu0 0.0
    %592 = vmatpush2.xpose.msra.mxu0 0.0
    %593 = vmatprep.subr.mxu0 0.0
    %594 = vmatpush2.xpose.msra.mxu0 0.0
    %595 = vmatprep.subr.mxu0 0.0
    %596 = vmatpush2.xpose.msra.mxu0 0.0
    %597 = vmatprep.subr.mxu0 0.0
    %598 = vmatpush2.xpose.msra.mxu0 0.0
    %599 = vmatprep.subr.mxu0 0.0
    %600 = vmatpush2.xpose.msra.mxu0 0.0
    %601 = vmatprep.subr.mxu0 0.0
    %602 = vmatpush2.xpose.msra.mxu0 0.0
    %603 = vmatprep.subr.mxu0 0.0
    %604 = vmatpush2.xpose.msra.mxu0 0.0
    %605 = vmatprep.subr.mxu0 0.0
    %606 = vmatpush2.xpose.msra.mxu0 0.0
    %607 = vmatprep.mubr.f32.mxu0 0.0
    %608 = vmatmul.mubr.f32.gmra.mxu0 %v539
    %v609 = vpop.f32.mrf.mxu0
    %v610 = vadd.f32 0.0, %v609
    %v611 = vpop.f32.mrf.mxu0
    %612 = vdwg.mxu0
    %v613 = vsel %vm129, %v532, -inf
    %614 = vmax.xlane.f32.xlu0 %v613
    %v615 = vpop.xlane.xlu0 %614
    %v616 = vsel %vm129, %v610, -inf
    %617 = vmax.xlane.f32.xlu0 %v616
    %v618 = vpop.xlane.xlu0 %617
    %v619 = vsub.f32 %v532, %v615
    %v620 = vsub.f32 %v610, %v618
    %v621 = vmul.f32 %v619, 1.442695
    %v622 = vpow.pop %v621
    %v623 = vmul.f32 %v620, 1.442695
    %v624 = vpow.pop %v623
    %v625 = vsel %vm129, %v622, 0.0
    %626 = vadd.xlane.f32.xlu0 %v625
    %v627 = vpop.xlane.xlu0 %626
    %v628 = vsel %vm129, %v624, 0.0
    %629 = vadd.xlane.f32.xlu0 %v628
    %v630 = vpop.xlane.xlu0 %629
    %v631 = vrcp.pop %v627
    %v632 = vmul.f32 %v622, %v631
    %v633 = vrcp.pop %v630
    %v634 = vmul.f32 %v624, %v633
    %635 = vrot.lane.b32.xlu0 %v112, 56
    %v636 = vpop.permute.xlu0 %635
    %v639 = vsel %vm129, %v632, 0
    %641 = vmatprep.subr.mxu0 0.0
    %642 = vmatpush1.msra.mxu0 0.0
    %643 = vmatprep.subr.mxu0 0.0
    %644 = vmatpush1.msra.mxu0 0.0
    %645 = vmatprep.subr.mxu0 0.0
    %646 = vmatpush1.msra.mxu0 0.0
    %647 = vmatprep.subr.mxu0 0.0
    %648 = vmatpush1.msra.mxu0 0.0
    %649 = vmatprep.subr.mxu0 0.0
    %650 = vmatpush1.msra.mxu0 0.0
    %651 = vmatprep.subr.mxu0 0.0
    %652 = vmatpush1.msra.mxu0 0.0
    %653 = vmatprep.subr.mxu0 0.0
    %654 = vmatpush1.msra.mxu0 0.0
    %655 = vmatprep.subr.mxu0 0.0
    %656 = vmatpush1.msra.mxu0 0.0
    %657 = vmatprep.subr.mxu0 0.0
    %658 = vmatpush1.msra.mxu0 0.0
    %659 = vmatprep.subr.mxu0 0.0
    %660 = vmatpush1.msra.mxu0 0.0
    %661 = vmatprep.subr.mxu0 0.0
    %662 = vmatpush1.msra.mxu0 0.0
    %663 = vmatprep.subr.mxu0 0.0
    %664 = vmatpush1.msra.mxu0 0.0
    %665 = vmatprep.subr.mxu0 0.0
    %666 = vmatpush1.msra.mxu0 0.0
    %667 = vmatprep.subr.mxu0 0.0
    %668 = vmatpush1.msra.mxu0 0.0
    %669 = vmatprep.subr.mxu0 0.0
    %670 = vmatpush1.msra.mxu0 0.0
    %671 = vmatprep.subr.mxu0 0.0
    %672 = vmatpush1.msra.mxu0 %v636
    %673 = vmatprep.subr.mxu0 0.0
    %674 = vmatpush2.msra.mxu0 0.0
    %675 = vmatprep.subr.mxu0 0.0
    %676 = vmatpush2.msra.mxu0 0.0
    %677 = vmatprep.subr.mxu0 0.0
    %678 = vmatpush2.msra.mxu0 0.0
    %679 = vmatprep.subr.mxu0 0.0
    %680 = vmatpush2.msra.mxu0 0.0
    %681 = vmatprep.subr.mxu0 0.0
    %682 = vmatpush2.msra.mxu0 0.0
    %683 = vmatprep.subr.mxu0 0.0
    %684 = vmatpush2.msra.mxu0 0.0
    %685 = vmatprep.subr.mxu0 0.0
    %686 = vmatpush2.msra.mxu0 0.0
    %687 = vmatprep.subr.mxu0 0.0
    %688 = vmatpush2.msra.mxu0 0.0
    %689 = vmatprep.subr.mxu0 0.0
    %690 = vmatpush2.msra.mxu0 0.0
    %691 = vmatprep.subr.mxu0 0.0
    %692 = vmatpush2.msra.mxu0 0.0
    %693 = vmatprep.subr.mxu0 0.0
    %694 = vmatpush2.msra.mxu0 0.0
    %695 = vmatprep.subr.mxu0 0.0
    %696 = vmatpush2.msra.mxu0 0.0
    %697 = vmatprep.subr.mxu0 0.0
    %698 = vmatpush2.msra.mxu0 0.0
    %699 = vmatprep.subr.mxu0 0.0
    %700 = vmatpush2.msra.mxu0 0.0
    %701 = vmatprep.subr.mxu0 0.0
    %702 = vmatpush2.msra.mxu0 0.0
    %703 = vmatprep.subr.mxu0 0.0
    %704 = vmatpush2.msra.mxu0 0.0
    %705 = vmatprep.mubr.f32.mxu0 0.0
    %706 = vmatmul.mubr.f32.gmra.mxu0 %v639
    %v707 = vpop.f32.mrf.mxu0
    %v708 = vadd.f32 0.0, %v707
    %v709 = vpop.f32.mrf.mxu0
    %710 = vdwg.mxu0
    %711 = vrot.lane.b32.xlu0 %v117, 56
    %v712 = vpop.permute.xlu0 %711
    %v715 = vsel %vm129, %v634, 0
    %717 = vmatprep.subr.mxu0 0.0
    %718 = vmatpush1.msra.mxu0 0.0
    %719 = vmatprep.subr.mxu0 0.0
    %720 = vmatpush1.msra.mxu0 0.0
    %721 = vmatprep.subr.mxu0 0.0
    %722 = vmatpush1.msra.mxu0 0.0
    %723 = vmatprep.subr.mxu0 0.0
    %724 = vmatpush1.msra.mxu0 0.0
    %725 = vmatprep.subr.mxu0 0.0
    %726 = vmatpush1.msra.mxu0 0.0
    %727 = vmatprep.subr.mxu0 0.0
    %728 = vmatpush1.msra.mxu0 0.0
    %729 = vmatprep.subr.mxu0 0.0
    %730 = vmatpush1.msra.mxu0 0.0
    %731 = vmatprep.subr.mxu0 0.0
    %732 = vmatpush1.msra.mxu0 0.0
    %733 = vmatprep.subr.mxu0 0.0
    %734 = vmatpush1.msra.mxu0 0.0
    %735 = vmatprep.subr.mxu0 0.0
    %736 = vmatpush1.msra.mxu0 0.0
    %737 = vmatprep.subr.mxu0 0.0
    %738 = vmatpush1.msra.mxu0 0.0
    %739 = vmatprep.subr.mxu0 0.0
    %740 = vmatpush1.msra.mxu0 0.0
    %741 = vmatprep.subr.mxu0 0.0
    %742 = vmatpush1.msra.mxu0 0.0
    %743 = vmatprep.subr.mxu0 0.0
    %744 = vmatpush1.msra.mxu0 0.0
    %745 = vmatprep.subr.mxu0 0.0
    %746 = vmatpush1.msra.mxu0 0.0
    %747 = vmatprep.subr.mxu0 0.0
    %748 = vmatpush1.msra.mxu0 %v712
    %749 = vmatprep.subr.mxu0 0.0
    %750 = vmatpush2.msra.mxu0 0.0
    %751 = vmatprep.subr.mxu0 0.0
    %752 = vmatpush2.msra.mxu0 0.0
    %753 = vmatprep.subr.mxu0 0.0
    %754 = vmatpush2.msra.mxu0 0.0
    %755 = vmatprep.subr.mxu0 0.0
    %756 = vmatpush2.msra.mxu0 0.0
    %757 = vmatprep.subr.mxu0 0.0
    %758 = vmatpush2.msra.mxu0 0.0
    %759 = vmatprep.subr.mxu0 0.0
    %760 = vmatpush2.msra.mxu0 0.0
    %761 = vmatprep.subr.mxu0 0.0
    %762 = vmatpush2.msra.mxu0 0.0
    %763 = vmatprep.subr.mxu0 0.0
    %764 = vmatpush2.msra.mxu0 0.0
    %765 = vmatprep.subr.mxu0 0.0
    %766 = vmatpush2.msra.mxu0 0.0
    %767 = vmatprep.subr.mxu0 0.0
    %768 = vmatpush2.msra.mxu0 0.0
    %769 = vmatprep.subr.mxu0 0.0
    %770 = vmatpush2.msra.mxu0 0.0
    %771 = vmatprep.subr.mxu0 0.0
    %772 = vmatpush2.msra.mxu0 0.0
    %773 = vmatprep.subr.mxu0 0.0
    %774 = vmatpush2.msra.mxu0 0.0
    %775 = vmatprep.subr.mxu0 0.0
    %776 = vmatpush2.msra.mxu0 0.0
    %777 = vmatprep.subr.mxu0 0.0
    %778 = vmatpush2.msra.mxu0 0.0
    %779 = vmatprep.subr.mxu0 0.0
    %780 = vmatpush2.msra.mxu0 0.0
    %781 = vmatprep.mubr.f32.mxu0 0.0
    %782 = vmatmul.mubr.f32.gmra.mxu0 %v715
    %v783 = vpop.f32.mrf.mxu0
    %v784 = vadd.f32 0.0, %v783
    %v785 = vpop.f32.mrf.mxu0
    %786 = vdwg.mxu0
    %v788 = vsel %vm129, %v708, 0
    %v791 = vsel %vm129, %v784, 0
    %793 = vmatprep.subr.mxu0 0.0
    %794 = vmatpush1.msra.mxu0 0.0
    %795 = vmatprep.subr.mxu0 0.0
    %796 = vmatpush1.msra.mxu0 0.0
    %797 = vmatprep.subr.mxu0 0.0
    %798 = vmatpush1.msra.mxu0 0.0
    %799 = vmatprep.subr.mxu0 0.0
    %800 = vmatpush1.msra.mxu0 0.0
    %801 = vmatprep.subr.mxu0 0.0
    %802 = vmatpush1.msra.mxu0 0.0
    %803 = vmatprep.subr.mxu0 0.0
    %804 = vmatpush1.msra.mxu0 0.0
    %805 = vmatprep.subr.mxu0 0.0
    %806 = vmatpush1.msra.mxu0 0.0
    %807 = vmatprep.subr.mxu0 0.0
    %808 = vmatpush1.msra.mxu0 0.0
    %809 = vmatprep.subr.mxu0 0.0
    %810 = vmatpush1.msra.mxu0 0.0
    %811 = vmatprep.subr.mxu0 0.0
    %812 = vmatpush1.msra.mxu0 0.0
    %813 = vmatprep.subr.mxu0 0.0
    %814 = vmatpush1.msra.mxu0 0.0
    %815 = vmatprep.subr.mxu0 0.0
    %816 = vmatpush1.msra.mxu0 0.0
    %817 = vmatprep.subr.mxu0 0.0
    %818 = vmatpush1.msra.mxu0 0.0
    %819 = vmatprep.subr.mxu0 0.0
    %820 = vmatpush1.msra.mxu0 0.0
    %821 = vmatprep.subr.mxu0 0.0
    %822 = vmatpush1.msra.mxu0 0.0
    %823 = vmatprep.subr.mxu0 0.0
    %824 = vmatpush1.msra.mxu0 %v123
    %825 = vmatprep.subr.mxu0 0.0
    %826 = vmatpush2.msra.mxu0 0.0
    %827 = vmatprep.subr.mxu0 0.0
    %828 = vmatpush2.msra.mxu0 0.0
    %829 = vmatprep.subr.mxu0 0.0
    %830 = vmatpush2.msra.mxu0 0.0
    %831 = vmatprep.subr.mxu0 0.0
    %832 = vmatpush2.msra.mxu0 0.0
    %833 = vmatprep.subr.mxu0 0.0
    %834 = vmatpush2.msra.mxu0 0.0
    %835 = vmatprep.subr.mxu0 0.0
    %836 = vmatpush2.msra.mxu0 0.0
    %837 = vmatprep.subr.mxu0 0.0
    %838 = vmatpush2.msra.mxu0 0.0
    %839 = vmatprep.subr.mxu0 0.0
    %840 = vmatpush2.msra.mxu0 0.0
    %841 = vmatprep.subr.mxu0 0.0
    %842 = vmatpush2.msra.mxu0 0.0
    %843 = vmatprep.subr.mxu0 0.0
    %844 = vmatpush2.msra.mxu0 0.0
    %845 = vmatprep.subr.mxu0 0.0
    %846 = vmatpush2.msra.mxu0 0.0
    %847 = vmatprep.subr.mxu0 0.0
    %848 = vmatpush2.msra.mxu0 0.0
    %849 = vmatprep.subr.mxu0 0.0
    %850 = vmatpush2.msra.mxu0 0.0
    %851 = vmatprep.subr.mxu0 0.0
    %852 = vmatpush2.msra.mxu0 0.0
    %853 = vmatprep.subr.mxu0 0.0
    %854 = vmatpush2.msra.mxu0 0.0
    %855 = vmatprep.subr.mxu0 0.0
    %856 = vmatpush2.msra.mxu0 0.0
    %857 = vmatprep.mubr.f32.mxu0 0.0
    %858 = vmatmul.mubr.f32.gmra.mxu0 %v788
    %v859 = vpop.f32.mrf.mxu0
    %v860 = vadd.f32 0.0, %v859
    %v861 = vpop.f32.mrf.mxu0
    %862 = vmatprep.mubr.f32.mxu0 0.0
    %863 = vmatmul.mubr.f32.gmra.mxu0 %v791
    %v864 = vpop.f32.mrf.mxu0
    %v865 = vadd.f32 0.0, %v864
    %v866 = vpop.f32.mrf.mxu0
    %867 = vdwg.mxu0
    %v869 = vsel %vm129, %v378, 0
    %v872 = vsel %vm129, %v454, 0
    %874 = vmatprep.subr.mxu0 0.0
    %875 = vmatpush1.msra.mxu0 0.0
    %876 = vmatprep.subr.mxu0 0.0
    %877 = vmatpush1.msra.mxu0 0.0
    %878 = vmatprep.subr.mxu0 0.0
    %879 = vmatpush1.msra.mxu0 0.0
    %880 = vmatprep.subr.mxu0 0.0
    %881 = vmatpush1.msra.mxu0 0.0
    %882 = vmatprep.subr.mxu0 0.0
    %883 = vmatpush1.msra.mxu0 0.0
    %884 = vmatprep.subr.mxu0 0.0
    %885 = vmatpush1.msra.mxu0 0.0
    %886 = vmatprep.subr.mxu0 0.0
    %887 = vmatpush1.msra.mxu0 0.0
    %888 = vmatprep.subr.mxu0 0.0
    %889 = vmatpush1.msra.mxu0 0.0
    %890 = vmatprep.subr.mxu0 0.0
    %891 = vmatpush1.msra.mxu0 0.0
    %892 = vmatprep.subr.mxu0 0.0
    %893 = vmatpush1.msra.mxu0 0.0
    %894 = vmatprep.subr.mxu0 0.0
    %895 = vmatpush1.msra.mxu0 0.0
    %896 = vmatprep.subr.mxu0 0.0
    %897 = vmatpush1.msra.mxu0 0.0
    %898 = vmatprep.subr.mxu0 0.0
    %899 = vmatpush1.msra.mxu0 0.0
    %900 = vmatprep.subr.mxu0 0.0
    %901 = vmatpush1.msra.mxu0 0.0
    %902 = vmatprep.subr.mxu0 0.0
    %903 = vmatpush1.msra.mxu0 0.0
    %904 = vmatprep.subr.mxu0 0.0
    %905 = vmatpush1.msra.mxu0 %v122
    %906 = vmatprep.subr.mxu0 0.0
    %907 = vmatpush2.msra.mxu0 0.0
    %908 = vmatprep.subr.mxu0 0.0
    %909 = vmatpush2.msra.mxu0 0.0
    %910 = vmatprep.subr.mxu0 0.0
    %911 = vmatpush2.msra.mxu0 0.0
    %912 = vmatprep.subr.mxu0 0.0
    %913 = vmatpush2.msra.mxu0 0.0
    %914 = vmatprep.subr.mxu0 0.0
    %915 = vmatpush2.msra.mxu0 0.0
    %916 = vmatprep.subr.mxu0 0.0
    %917 = vmatpush2.msra.mxu0 0.0
    %918 = vmatprep.subr.mxu0 0.0
    %919 = vmatpush2.msra.mxu0 0.0
    %920 = vmatprep.subr.mxu0 0.0
    %921 = vmatpush2.msra.mxu0 0.0
    %922 = vmatprep.subr.mxu0 0.0
    %923 = vmatpush2.msra.mxu0 0.0
    %924 = vmatprep.subr.mxu0 0.0
    %925 = vmatpush2.msra.mxu0 0.0
    %926 = vmatprep.subr.mxu0 0.0
    %927 = vmatpush2.msra.mxu0 0.0
    %928 = vmatprep.subr.mxu0 0.0
    %929 = vmatpush2.msra.mxu0 0.0
    %930 = vmatprep.subr.mxu0 0.0
    %931 = vmatpush2.msra.mxu0 0.0
    %932 = vmatprep.subr.mxu0 0.0
    %933 = vmatpush2.msra.mxu0 0.0
    %934 = vmatprep.subr.mxu0 0.0
    %935 = vmatpush2.msra.mxu0 0.0
    %936 = vmatprep.subr.mxu0 0.0
    %937 = vmatpush2.msra.mxu0 0.0
    %938 = vmatprep.mubr.f32.mxu0 0.0
    %939 = vmatmul.mubr.f32.gmra.mxu0 %v869
    %v940 = vpop.f32.mrf.mxu0
    %v941 = vadd.f32 %v860, %v940
    %v942 = vpop.f32.mrf.mxu0
    %943 = vmatprep.mubr.f32.mxu0 0.0
    %944 = vmatmul.mubr.f32.gmra.mxu0 %v872
    %v945 = vpop.f32.mrf.mxu0
    %v946 = vadd.f32 %v865, %v945
    %v947 = vpop.f32.mrf.mxu0
    %948 = vdwg.mxu0
    %949 = vrot.lane.b32.xlu0 %v120, 112
    %v950 = vpop.permute.xlu0 %949
    %951 = vrot.lane.b32.xlu0 %v112, 80
    %v952 = vpop.permute.xlu0 %951
    %v953 = vsel %vm129, %v950, 0
    %v955 = vsel %vm129, %v952, 0
    %957 = vmatprep.subr.mxu0 0.0
    %958 = vmatpush1.xpose.msra.mxu0 0.0
    %959 = vmatprep.subr.mxu0 0.0
    %960 = vmatpush1.xpose.msra.mxu0 0.0
    %961 = vmatprep.subr.mxu0 0.0
    %962 = vmatpush1.xpose.msra.mxu0 0.0
    %963 = vmatprep.subr.mxu0 0.0
    %964 = vmatpush1.xpose.msra.mxu0 0.0
    %965 = vmatprep.subr.mxu0 0.0
    %966 = vmatpush1.xpose.msra.mxu0 0.0
    %967 = vmatprep.subr.mxu0 0.0
    %968 = vmatpush1.xpose.msra.mxu0 0.0
    %969 = vmatprep.subr.mxu0 0.0
    %970 = vmatpush1.xpose.msra.mxu0 0.0
    %971 = vmatprep.subr.mxu0 0.0
    %972 = vmatpush1.xpose.msra.mxu0 0.0
    %973 = vmatprep.subr.mxu0 0.0
    %974 = vmatpush1.xpose.msra.mxu0 0.0
    %975 = vmatprep.subr.mxu0 0.0
    %976 = vmatpush1.xpose.msra.mxu0 0.0
    %977 = vmatprep.subr.mxu0 0.0
    %978 = vmatpush1.xpose.msra.mxu0 0.0
    %979 = vmatprep.subr.mxu0 0.0
    %980 = vmatpush1.xpose.msra.mxu0 0.0
    %981 = vmatprep.subr.mxu0 0.0
    %982 = vmatpush1.xpose.msra.mxu0 0.0
    %983 = vmatprep.subr.mxu0 0.0
    %984 = vmatpush1.xpose.msra.mxu0 0.0
    %985 = vmatprep.subr.mxu0 0.0
    %986 = vmatpush1.xpose.msra.mxu0 0.0
    %987 = vmatprep.subr.mxu0 0.0
    %988 = vmatpush1.xpose.msra.mxu0 %v955
    %989 = vmatprep.subr.mxu0 0.0
    %990 = vmatpush2.xpose.msra.mxu0 0.0
    %991 = vmatprep.subr.mxu0 0.0
    %992 = vmatpush2.xpose.msra.mxu0 0.0
    %993 = vmatprep.subr.mxu0 0.0
    %994 = vmatpush2.xpose.msra.mxu0 0.0
    %995 = vmatprep.subr.mxu0 0.0
    %996 = vmatpush2.xpose.msra.mxu0 0.0
    %997 = vmatprep.subr.mxu0 0.0
    %998 = vmatpush2.xpose.msra.mxu0 0.0
    %999 = vmatprep.subr.mxu0 0.0
    %1000 = vmatpush2.xpose.msra.mxu0 0.0
    %1001 = vmatprep.subr.mxu0 0.0
    %1002 = vmatpush2.xpose.msra.mxu0 0.0
    %1003 = vmatprep.subr.mxu0 0.0
    %1004 = vmatpush2.xpose.msra.mxu0 0.0
    %1005 = vmatprep.subr.mxu0 0.0
    %1006 = vmatpush2.xpose.msra.mxu0 0.0
    %1007 = vmatprep.subr.mxu0 0.0
    %1008 = vmatpush2.xpose.msra.mxu0 0.0
    %1009 = vmatprep.subr.mxu0 0.0
    %1010 = vmatpush2.xpose.msra.mxu0 0.0
    %1011 = vmatprep.subr.mxu0 0.0
    %1012 = vmatpush2.xpose.msra.mxu0 0.0
    %1013 = vmatprep.subr.mxu0 0.0
    %1014 = vmatpush2.xpose.msra.mxu0 0.0
    %1015 = vmatprep.subr.mxu0 0.0
    %1016 = vmatpush2.xpose.msra.mxu0 0.0
    %1017 = vmatprep.subr.mxu0 0.0
    %1018 = vmatpush2.xpose.msra.mxu0 0.0
    %1019 = vmatprep.subr.mxu0 0.0
    %1020 = vmatpush2.xpose.msra.mxu0 0.0
    %1021 = vmatprep.mubr.f32.mxu0 0.0
    %1022 = vmatmul.mubr.f32.gmra.mxu0 %v953
    %v1023 = vpop.f32.mrf.mxu0
    %v1024 = vadd.f32 0.0, %v1023
    %v1025 = vpop.f32.mrf.mxu0
    %1026 = vdwg.mxu0
    %1027 = vrot.lane.b32.xlu0 %v121, 112
    %v1028 = vpop.permute.xlu0 %1027
    %1029 = vrot.lane.b32.xlu0 %v117, 80
    %v1030 = vpop.permute.xlu0 %1029
    %v1031 = vsel %vm129, %v1028, 0
    %v1033 = vsel %vm129, %v1030, 0
    %1035 = vmatprep.subr.mxu0 0.0
    %1036 = vmatpush1.xpose.msra.mxu0 0.0
    %1037 = vmatprep.subr.mxu0 0.0
    %1038 = vmatpush1.xpose.msra.mxu0 0.0
    %1039 = vmatprep.subr.mxu0 0.0
    %1040 = vmatpush1.xpose.msra.mxu0 0.0
    %1041 = vmatprep.subr.mxu0 0.0
    %1042 = vmatpush1.xpose.msra.mxu0 0.0
    %1043 = vmatprep.subr.mxu0 0.0
    %1044 = vmatpush1.xpose.msra.mxu0 0.0
    %1045 = vmatprep.subr.mxu0 0.0
    %1046 = vmatpush1.xpose.msra.mxu0 0.0
    %1047 = vmatprep.subr.mxu0 0.0
    %1048 = vmatpush1.xpose.msra.mxu0 0.0
    %1049 = vmatprep.subr.mxu0 0.0
    %1050 = vmatpush1.xpose.msra.mxu0 0.0
    %1051 = vmatprep.subr.mxu0 0.0
    %1052 = vmatpush1.xpose.msra.mxu0 0.0
    %1053 = vmatprep.subr.mxu0 0.0
    %1054 = vmatpush1.xpose.msra.mxu0 0.0
    %1055 = vmatprep.subr.mxu0 0.0
    %1056 = vmatpush1.xpose.msra.mxu0 0.0
    %1057 = vmatprep.subr.mxu0 0.0
    %1058 = vmatpush1.xpose.msra.mxu0 0.0
    %1059 = vmatprep.subr.mxu0 0.0
    %1060 = vmatpush1.xpose.msra.mxu0 0.0
    %1061 = vmatprep.subr.mxu0 0.0
    %1062 = vmatpush1.xpose.msra.mxu0 0.0
    %1063 = vmatprep.subr.mxu0 0.0
    %1064 = vmatpush1.xpose.msra.mxu0 0.0
    %1065 = vmatprep.subr.mxu0 0.0
    %1066 = vmatpush1.xpose.msra.mxu0 %v1033
    %1067 = vmatprep.subr.mxu0 0.0
    %1068 = vmatpush2.xpose.msra.mxu0 0.0
    %1069 = vmatprep.subr.mxu0 0.0
    %1070 = vmatpush2.xpose.msra.mxu0 0.0
    %1071 = vmatprep.subr.mxu0 0.0
    %1072 = vmatpush2.xpose.msra.mxu0 0.0
    %1073 = vmatprep.subr.mxu0 0.0
    %1074 = vmatpush2.xpose.msra.mxu0 0.0
    %1075 = vmatprep.subr.mxu0 0.0
    %1076 = vmatpush2.xpose.msra.mxu0 0.0
    %1077 = vmatprep.subr.mxu0 0.0
    %1078 = vmatpush2.xpose.msra.mxu0 0.0
    %1079 = vmatprep.subr.mxu0 0.0
    %1080 = vmatpush2.xpose.msra.mxu0 0.0
    %1081 = vmatprep.subr.mxu0 0.0
    %1082 = vmatpush2.xpose.msra.mxu0 0.0
    %1083 = vmatprep.subr.mxu0 0.0
    %1084 = vmatpush2.xpose.msra.mxu0 0.0
    %1085 = vmatprep.subr.mxu0 0.0
    %1086 = vmatpush2.xpose.msra.mxu0 0.0
    %1087 = vmatprep.subr.mxu0 0.0
    %1088 = vmatpush2.xpose.msra.mxu0 0.0
    %1089 = vmatprep.subr.mxu0 0.0
    %1090 = vmatpush2.xpose.msra.mxu0 0.0
    %1091 = vmatprep.subr.mxu0 0.0
    %1092 = vmatpush2.xpose.msra.mxu0 0.0
    %1093 = vmatprep.subr.mxu0 0.0
    %1094 = vmatpush2.xpose.msra.mxu0 0.0
    %1095 = vmatprep.subr.mxu0 0.0
    %1096 = vmatpush2.xpose.msra.mxu0 0.0
    %1097 = vmatprep.subr.mxu0 0.0
    %1098 = vmatpush2.xpose.msra.mxu0 0.0
    %1099 = vmatprep.mubr.f32.mxu0 0.0
    %1100 = vmatmul.mubr.f32.gmra.mxu0 %v1031
    %v1101 = vpop.f32.mrf.mxu0
    %v1102 = vadd.f32 0.0, %v1101
    %v1103 = vpop.f32.mrf.mxu0
    %1104 = vdwg.mxu0
    %v1105 = vsel %vm129, %v1024, -inf
    %1106 = vmax.xlane.f32.xlu0 %v1105
    %v1107 = vpop.xlane.xlu0 %1106
    %v1108 = vsel %vm129, %v1102, -inf
    %1109 = vmax.xlane.f32.xlu0 %v1108
    %v1110 = vpop.xlane.xlu0 %1109
    %v1111 = vsub.f32 %v1024, %v1107
    %v1112 = vsub.f32 %v1102, %v1110
    %v1113 = vmul.f32 %v1111, 1.442695
    %v1114 = vpow.pop %v1113
    %v1115 = vmul.f32 %v1112, 1.442695
    %v1116 = vpow.pop %v1115
    %v1117 = vsel %vm129, %v1114, 0.0
    %1118 = vadd.xlane.f32.xlu0 %v1117
    %v1119 = vpop.xlane.xlu0 %1118
    %v1120 = vsel %vm129, %v1116, 0.0
    %1121 = vadd.xlane.f32.xlu0 %v1120
    %v1122 = vpop.xlane.xlu0 %1121
    %v1123 = vrcp.pop %v1119
    %v1124 = vmul.f32 %v1114, %v1123
    %v1125 = vrcp.pop %v1122
    %v1126 = vmul.f32 %v1116, %v1125
    %1127 = vrot.lane.b32.xlu0 %v112, 48
    %v1128 = vpop.permute.xlu0 %1127
    %v1131 = vsel %vm129, %v1124, 0
    %1133 = vmatprep.subr.mxu0 0.0
    %1134 = vmatpush1.msra.mxu0 0.0
    %1135 = vmatprep.subr.mxu0 0.0
    %1136 = vmatpush1.msra.mxu0 0.0
    %1137 = vmatprep.subr.mxu0 0.0
    %1138 = vmatpush1.msra.mxu0 0.0
    %1139 = vmatprep.subr.mxu0 0.0
    %1140 = vmatpush1.msra.mxu0 0.0
    %1141 = vmatprep.subr.mxu0 0.0
    %1142 = vmatpush1.msra.mxu0 0.0
    %1143 = vmatprep.subr.mxu0 0.0
    %1144 = vmatpush1.msra.mxu0 0.0
    %1145 = vmatprep.subr.mxu0 0.0
    %1146 = vmatpush1.msra.mxu0 0.0
    %1147 = vmatprep.subr.mxu0 0.0
    %1148 = vmatpush1.msra.mxu0 0.0
    %1149 = vmatprep.subr.mxu0 0.0
    %1150 = vmatpush1.msra.mxu0 0.0
    %1151 = vmatprep.subr.mxu0 0.0
    %1152 = vmatpush1.msra.mxu0 0.0
    %1153 = vmatprep.subr.mxu0 0.0
    %1154 = vmatpush1.msra.mxu0 0.0
    %1155 = vmatprep.subr.mxu0 0.0
    %1156 = vmatpush1.msra.mxu0 0.0
    %1157 = vmatprep.subr.mxu0 0.0
    %1158 = vmatpush1.msra.mxu0 0.0
    %1159 = vmatprep.subr.mxu0 0.0
    %1160 = vmatpush1.msra.mxu0 0.0
    %1161 = vmatprep.subr.mxu0 0.0
    %1162 = vmatpush1.msra.mxu0 0.0
    %1163 = vmatprep.subr.mxu0 0.0
    %1164 = vmatpush1.msra.mxu0 %v1128
    %1165 = vmatprep.subr.mxu0 0.0
    %1166 = vmatpush2.msra.mxu0 0.0
    %1167 = vmatprep.subr.mxu0 0.0
    %1168 = vmatpush2.msra.mxu0 0.0
    %1169 = vmatprep.subr.mxu0 0.0
    %1170 = vmatpush2.msra.mxu0 0.0
    %1171 = vmatprep.subr.mxu0 0.0
    %1172 = vmatpush2.msra.mxu0 0.0
    %1173 = vmatprep.subr.mxu0 0.0
    %1174 = vmatpush2.msra.mxu0 0.0
    %1175 = vmatprep.subr.mxu0 0.0
    %1176 = vmatpush2.msra.mxu0 0.0
    %1177 = vmatprep.subr.mxu0 0.0
    %1178 = vmatpush2.msra.mxu0 0.0
    %1179 = vmatprep.subr.mxu0 0.0
    %1180 = vmatpush2.msra.mxu0 0.0
    %1181 = vmatprep.subr.mxu0 0.0
    %1182 = vmatpush2.msra.mxu0 0.0
    %1183 = vmatprep.subr.mxu0 0.0
    %1184 = vmatpush2.msra.mxu0 0.0
    %1185 = vmatprep.subr.mxu0 0.0
    %1186 = vmatpush2.msra.mxu0 0.0
    %1187 = vmatprep.subr.mxu0 0.0
    %1188 = vmatpush2.msra.mxu0 0.0
    %1189 = vmatprep.subr.mxu0 0.0
    %1190 = vmatpush2.msra.mxu0 0.0
    %1191 = vmatprep.subr.mxu0 0.0
    %1192 = vmatpush2.msra.mxu0 0.0
    %1193 = vmatprep.subr.mxu0 0.0
    %1194 = vmatpush2.msra.mxu0 0.0
    %1195 = vmatprep.subr.mxu0 0.0
    %1196 = vmatpush2.msra.mxu0 0.0
    %1197 = vmatprep.mubr.f32.mxu0 0.0
    %1198 = vmatmul.mubr.f32.gmra.mxu0 %v1131
    %v1199 = vpop.f32.mrf.mxu0
    %v1200 = vadd.f32 0.0, %v1199
    %v1201 = vpop.f32.mrf.mxu0
    %1202 = vdwg.mxu0
    %1203 = vrot.lane.b32.xlu0 %v117, 48
    %v1204 = vpop.permute.xlu0 %1203
    %v1207 = vsel %vm129, %v1126, 0
    %1209 = vmatprep.subr.mxu0 0.0
    %1210 = vmatpush1.msra.mxu0 0.0
    %1211 = vmatprep.subr.mxu0 0.0
    %1212 = vmatpush1.msra.mxu0 0.0
    %1213 = vmatprep.subr.mxu0 0.0
    %1214 = vmatpush1.msra.mxu0 0.0
    %1215 = vmatprep.subr.mxu0 0.0
    %1216 = vmatpush1.msra.mxu0 0.0
    %1217 = vmatprep.subr.mxu0 0.0
    %1218 = vmatpush1.msra.mxu0 0.0
    %1219 = vmatprep.subr.mxu0 0.0
    %1220 = vmatpush1.msra.mxu0 0.0
    %1221 = vmatprep.subr.mxu0 0.0
    %1222 = vmatpush1.msra.mxu0 0.0
    %1223 = vmatprep.subr.mxu0 0.0
    %1224 = vmatpush1.msra.mxu0 0.0
    %1225 = vmatprep.subr.mxu0 0.0
    %1226 = vmatpush1.msra.mxu0 0.0
    %1227 = vmatprep.subr.mxu0 0.0
    %1228 = vmatpush1.msra.mxu0 0.0
    %1229 = vmatprep.subr.mxu0 0.0
    %1230 = vmatpush1.msra.mxu0 0.0
    %1231 = vmatprep.subr.mxu0 0.0
    %1232 = vmatpush1.msra.mxu0 0.0
    %1233 = vmatprep.subr.mxu0 0.0
    %1234 = vmatpush1.msra.mxu0 0.0
    %1235 = vmatprep.subr.mxu0 0.0
    %1236 = vmatpush1.msra.mxu0 0.0
    %1237 = vmatprep.subr.mxu0 0.0
    %1238 = vmatpush1.msra.mxu0 0.0
    %1239 = vmatprep.subr.mxu0 0.0
    %1240 = vmatpush1.msra.mxu0 %v1204
    %1241 = vmatprep.subr.mxu0 0.0
    %1242 = vmatpush2.msra.mxu0 0.0
    %1243 = vmatprep.subr.mxu0 0.0
    %1244 = vmatpush2.msra.mxu0 0.0
    %1245 = vmatprep.subr.mxu0 0.0
    %1246 = vmatpush2.msra.mxu0 0.0
    %1247 = vmatprep.subr.mxu0 0.0
    %1248 = vmatpush2.msra.mxu0 0.0
    %1249 = vmatprep.subr.mxu0 0.0
    %1250 = vmatpush2.msra.mxu0 0.0
    %1251 = vmatprep.subr.mxu0 0.0
    %1252 = vmatpush2.msra.mxu0 0.0
    %1253 = vmatprep.subr.mxu0 0.0
    %1254 = vmatpush2.msra.mxu0 0.0
    %1255 = vmatprep.subr.mxu0 0.0
    %1256 = vmatpush2.msra.mxu0 0.0
    %1257 = vmatprep.subr.mxu0 0.0
    %1258 = vmatpush2.msra.mxu0 0.0
    %1259 = vmatprep.subr.mxu0 0.0
    %1260 = vmatpush2.msra.mxu0 0.0
    %1261 = vmatprep.subr.mxu0 0.0
    %1262 = vmatpush2.msra.mxu0 0.0
    %1263 = vmatprep.subr.mxu0 0.0
    %1264 = vmatpush2.msra.mxu0 0.0
    %1265 = vmatprep.subr.mxu0 0.0
    %1266 = vmatpush2.msra.mxu0 0.0
    %1267 = vmatprep.subr.mxu0 0.0
    %1268 = vmatpush2.msra.mxu0 0.0
    %1269 = vmatprep.subr.mxu0 0.0
    %1270 = vmatpush2.msra.mxu0 0.0
    %1271 = vmatprep.subr.mxu0 0.0
    %1272 = vmatpush2.msra.mxu0 0.0
    %1273 = vmatprep.mubr.f32.mxu0 0.0
    %1274 = vmatmul.mubr.f32.gmra.mxu0 %v1207
    %v1275 = vpop.f32.mrf.mxu0
    %v1276 = vadd.f32 0.0, %v1275
    %v1277 = vpop.f32.mrf.mxu0
    %1278 = vdwg.mxu0
    %v1280 = vsel %vm129, %v1200, 0
    %v1283 = vsel %vm129, %v1276, 0
    %1285 = vmatprep.subr.mxu0 0.0
    %1286 = vmatpush1.msra.mxu0 0.0
    %1287 = vmatprep.subr.mxu0 0.0
    %1288 = vmatpush1.msra.mxu0 0.0
    %1289 = vmatprep.subr.mxu0 0.0
    %1290 = vmatpush1.msra.mxu0 0.0
    %1291 = vmatprep.subr.mxu0 0.0
    %1292 = vmatpush1.msra.mxu0 0.0
    %1293 = vmatprep.subr.mxu0 0.0
    %1294 = vmatpush1.msra.mxu0 0.0
    %1295 = vmatprep.subr.mxu0 0.0
    %1296 = vmatpush1.msra.mxu0 0.0
    %1297 = vmatprep.subr.mxu0 0.0
    %1298 = vmatpush1.msra.mxu0 0.0
    %1299 = vmatprep.subr.mxu0 0.0
    %1300 = vmatpush1.msra.mxu0 0.0
    %1301 = vmatprep.subr.mxu0 0.0
    %1302 = vmatpush1.msra.mxu0 0.0
    %1303 = vmatprep.subr.mxu0 0.0
    %1304 = vmatpush1.msra.mxu0 0.0
    %1305 = vmatprep.subr.mxu0 0.0
    %1306 = vmatpush1.msra.mxu0 0.0
    %1307 = vmatprep.subr.mxu0 0.0
    %1308 = vmatpush1.msra.mxu0 0.0
    %1309 = vmatprep.subr.mxu0 0.0
    %1310 = vmatpush1.msra.mxu0 0.0
    %1311 = vmatprep.subr.mxu0 0.0
    %1312 = vmatpush1.msra.mxu0 0.0
    %1313 = vmatprep.subr.mxu0 0.0
    %1314 = vmatpush1.msra.mxu0 0.0
    %1315 = vmatprep.subr.mxu0 0.0
    %1316 = vmatpush1.msra.mxu0 %v124
    %1317 = vmatprep.subr.mxu0 0.0
    %1318 = vmatpush2.msra.mxu0 0.0
    %1319 = vmatprep.subr.mxu0 0.0
    %1320 = vmatpush2.msra.mxu0 0.0
    %1321 = vmatprep.subr.mxu0 0.0
    %1322 = vmatpush2.msra.mxu0 0.0
    %1323 = vmatprep.subr.mxu0 0.0
    %1324 = vmatpush2.msra.mxu0 0.0
    %1325 = vmatprep.subr.mxu0 0.0
    %1326 = vmatpush2.msra.mxu0 0.0
    %1327 = vmatprep.subr.mxu0 0.0
    %1328 = vmatpush2.msra.mxu0 0.0
    %1329 = vmatprep.subr.mxu0 0.0
    %1330 = vmatpush2.msra.mxu0 0.0
    %1331 = vmatprep.subr.mxu0 0.0
    %1332 = vmatpush2.msra.mxu0 0.0
    %1333 = vmatprep.subr.mxu0 0.0
    %1334 = vmatpush2.msra.mxu0 0.0
    %1335 = vmatprep.subr.mxu0 0.0
    %1336 = vmatpush2.msra.mxu0 0.0
    %1337 = vmatprep.subr.mxu0 0.0
    %1338 = vmatpush2.msra.mxu0 0.0
    %1339 = vmatprep.subr.mxu0 0.0
    %1340 = vmatpush2.msra.mxu0 0.0
    %1341 = vmatprep.subr.mxu0 0.0
    %1342 = vmatpush2.msra.mxu0 0.0
    %1343 = vmatprep.subr.mxu0 0.0
    %1344 = vmatpush2.msra.mxu0 0.0
    %1345 = vmatprep.subr.mxu0 0.0
    %1346 = vmatpush2.msra.mxu0 0.0
    %1347 = vmatprep.subr.mxu0 0.0
    %1348 = vmatpush2.msra.mxu0 0.0
    %1349 = vmatprep.mubr.f32.mxu0 0.0
    %1350 = vmatmul.mubr.f32.gmra.mxu0 %v1280
    %v1351 = vpop.f32.mrf.mxu0
    %v1352 = vadd.f32 0.0, %v1351
    %v1353 = vpop.f32.mrf.mxu0
    %1354 = vmatprep.mubr.f32.mxu0 0.0
    %1355 = vmatmul.mubr.f32.gmra.mxu0 %v1283
    %v1356 = vpop.f32.mrf.mxu0
    %v1357 = vadd.f32 0.0, %v1356
    %v1358 = vpop.f32.mrf.mxu0
    %1359 = vdwg.mxu0
    %v1360 = vadd.f32 %v941, %v1352
    %v1361 = vadd.f32 %v946, %v1357
    %1362 = vrot.lane.b32.xlu0 %v120, 104
    %v1363 = vpop.permute.xlu0 %1362
    %1364 = vrot.lane.b32.xlu0 %v112, 72
    %v1365 = vpop.permute.xlu0 %1364
    %v1366 = vsel %vm129, %v1363, 0
    %v1368 = vsel %vm129, %v1365, 0
    %1370 = vmatprep.subr.mxu0 0.0
    %1371 = vmatpush1.xpose.msra.mxu0 0.0
    %1372 = vmatprep.subr.mxu0 0.0
    %1373 = vmatpush1.xpose.msra.mxu0 0.0
    %1374 = vmatprep.subr.mxu0 0.0
    %1375 = vmatpush1.xpose.msra.mxu0 0.0
    %1376 = vmatprep.subr.mxu0 0.0
    %1377 = vmatpush1.xpose.msra.mxu0 0.0
    %1378 = vmatprep.subr.mxu0 0.0
    %1379 = vmatpush1.xpose.msra.mxu0 0.0
    %1380 = vmatprep.subr.mxu0 0.0
    %1381 = vmatpush1.xpose.msra.mxu0 0.0
    %1382 = vmatprep.subr.mxu0 0.0
    %1383 = vmatpush1.xpose.msra.mxu0 0.0
    %1384 = vmatprep.subr.mxu0 0.0
    %1385 = vmatpush1.xpose.msra.mxu0 0.0
    %1386 = vmatprep.subr.mxu0 0.0
    %1387 = vmatpush1.xpose.msra.mxu0 0.0
    %1388 = vmatprep.subr.mxu0 0.0
    %1389 = vmatpush1.xpose.msra.mxu0 0.0
    %1390 = vmatprep.subr.mxu0 0.0
    %1391 = vmatpush1.xpose.msra.mxu0 0.0
    %1392 = vmatprep.subr.mxu0 0.0
    %1393 = vmatpush1.xpose.msra.mxu0 0.0
    %1394 = vmatprep.subr.mxu0 0.0
    %1395 = vmatpush1.xpose.msra.mxu0 0.0
    %1396 = vmatprep.subr.mxu0 0.0
    %1397 = vmatpush1.xpose.msra.mxu0 0.0
    %1398 = vmatprep.subr.mxu0 0.0
    %1399 = vmatpush1.xpose.msra.mxu0 0.0
    %1400 = vmatprep.subr.mxu0 0.0
    %1401 = vmatpush1.xpose.msra.mxu0 %v1368
    %1402 = vmatprep.subr.mxu0 0.0
    %1403 = vmatpush2.xpose.msra.mxu0 0.0
    %1404 = vmatprep.subr.mxu0 0.0
    %1405 = vmatpush2.xpose.msra.mxu0 0.0
    %1406 = vmatprep.subr.mxu0 0.0
    %1407 = vmatpush2.xpose.msra.mxu0 0.0
    %1408 = vmatprep.subr.mxu0 0.0
    %1409 = vmatpush2.xpose.msra.mxu0 0.0
    %1410 = vmatprep.subr.mxu0 0.0
    %1411 = vmatpush2.xpose.msra.mxu0 0.0
    %1412 = vmatprep.subr.mxu0 0.0
    %1413 = vmatpush2.xpose.msra.mxu0 0.0
    %1414 = vmatprep.subr.mxu0 0.0
    %1415 = vmatpush2.xpose.msra.mxu0 0.0
    %1416 = vmatprep.subr.mxu0 0.0
    %1417 = vmatpush2.xpose.msra.mxu0 0.0
    %1418 = vmatprep.subr.mxu0 0.0
    %1419 = vmatpush2.xpose.msra.mxu0 0.0
    %1420 = vmatprep.subr.mxu0 0.0
    %1421 = vmatpush2.xpose.msra.mxu0 0.0
    %1422 = vmatprep.subr.mxu0 0.0
    %1423 = vmatpush2.xpose.msra.mxu0 0.0
    %1424 = vmatprep.subr.mxu0 0.0
    %1425 = vmatpush2.xpose.msra.mxu0 0.0
    %1426 = vmatprep.subr.mxu0 0.0
    %1427 = vmatpush2.xpose.msra.mxu0 0.0
    %1428 = vmatprep.subr.mxu0 0.0
    %1429 = vmatpush2.xpose.msra.mxu0 0.0
    %1430 = vmatprep.subr.mxu0 0.0
    %1431 = vmatpush2.xpose.msra.mxu0 0.0
    %1432 = vmatprep.subr.mxu0 0.0
    %1433 = vmatpush2.xpose.msra.mxu0 0.0
    %1434 = vmatprep.mubr.f32.mxu0 0.0
    %1435 = vmatmul.mubr.f32.gmra.mxu0 %v1366
    %v1436 = vpop.f32.mrf.mxu0
    %v1437 = vadd.f32 0.0, %v1436
    %v1438 = vpop.f32.mrf.mxu0
    %1439 = vdwg.mxu0
    %1440 = vrot.lane.b32.xlu0 %v121, 104
    %v1441 = vpop.permute.xlu0 %1440
    %1442 = vrot.lane.b32.xlu0 %v117, 72
    %v1443 = vpop.permute.xlu0 %1442
    %v1444 = vsel %vm129, %v1441, 0
    %v1446 = vsel %vm129, %v1443, 0
    %1448 = vmatprep.subr.mxu0 0.0
    %1449 = vmatpush1.xpose.msra.mxu0 0.0
    %1450 = vmatprep.subr.mxu0 0.0
    %1451 = vmatpush1.xpose.msra.mxu0 0.0
    %1452 = vmatprep.subr.mxu0 0.0
    %1453 = vmatpush1.xpose.msra.mxu0 0.0
    %1454 = vmatprep.subr.mxu0 0.0
    %1455 = vmatpush1.xpose.msra.mxu0 0.0
    %1456 = vmatprep.subr.mxu0 0.0
    %1457 = vmatpush1.xpose.msra.mxu0 0.0
    %1458 = vmatprep.subr.mxu0 0.0
    %1459 = vmatpush1.xpose.msra.mxu0 0.0
    %1460 = vmatprep.subr.mxu0 0.0
    %1461 = vmatpush1.xpose.msra.mxu0 0.0
    %1462 = vmatprep.subr.mxu0 0.0
    %1463 = vmatpush1.xpose.msra.mxu0 0.0
    %1464 = vmatprep.subr.mxu0 0.0
    %1465 = vmatpush1.xpose.msra.mxu0 0.0
    %1466 = vmatprep.subr.mxu0 0.0
    %1467 = vmatpush1.xpose.msra.mxu0 0.0
    %1468 = vmatprep.subr.mxu0 0.0
    %1469 = vmatpush1.xpose.msra.mxu0 0.0
    %1470 = vmatprep.subr.mxu0 0.0
    %1471 = vmatpush1.xpose.msra.mxu0 0.0
    %1472 = vmatprep.subr.mxu0 0.0
    %1473 = vmatpush1.xpose.msra.mxu0 0.0
    %1474 = vmatprep.subr.mxu0 0.0
    %1475 = vmatpush1.xpose.msra.mxu0 0.0
    %1476 = vmatprep.subr.mxu0 0.0
    %1477 = vmatpush1.xpose.msra.mxu0 0.0
    %1478 = vmatprep.subr.mxu0 0.0
    %1479 = vmatpush1.xpose.msra.mxu0 %v1446
    %1480 = vmatprep.subr.mxu0 0.0
    %1481 = vmatpush2.xpose.msra.mxu0 0.0
    %1482 = vmatprep.subr.mxu0 0.0
    %1483 = vmatpush2.xpose.msra.mxu0 0.0
    %1484 = vmatprep.subr.mxu0 0.0
    %1485 = vmatpush2.xpose.msra.mxu0 0.0
    %1486 = vmatprep.subr.mxu0 0.0
    %1487 = vmatpush2.xpose.msra.mxu0 0.0
    %1488 = vmatprep.subr.mxu0 0.0
    %1489 = vmatpush2.xpose.msra.mxu0 0.0
    %1490 = vmatprep.subr.mxu0 0.0
    %1491 = vmatpush2.xpose.msra.mxu0 0.0
    %1492 = vmatprep.subr.mxu0 0.0
    %1493 = vmatpush2.xpose.msra.mxu0 0.0
    %1494 = vmatprep.subr.mxu0 0.0
    %1495 = vmatpush2.xpose.msra.mxu0 0.0
    %1496 = vmatprep.subr.mxu0 0.0
    %1497 = vmatpush2.xpose.msra.mxu0 0.0
    %1498 = vmatprep.subr.mxu0 0.0
    %1499 = vmatpush2.xpose.msra.mxu0 0.0
    %1500 = vmatprep.subr.mxu0 0.0
    %1501 = vmatpush2.xpose.msra.mxu0 0.0
    %1502 = vmatprep.subr.mxu0 0.0
    %1503 = vmatpush2.xpose.msra.mxu0 0.0
    %1504 = vmatprep.subr.mxu0 0.0
    %1505 = vmatpush2.xpose.msra.mxu0 0.0
    %1506 = vmatprep.subr.mxu0 0.0
    %1507 = vmatpush2.xpose.msra.mxu0 0.0
    %1508 = vmatprep.subr.mxu0 0.0
    %1509 = vmatpush2.xpose.msra.mxu0 0.0
    %1510 = vmatprep.subr.mxu0 0.0
    %1511 = vmatpush2.xpose.msra.mxu0 0.0
    %1512 = vmatprep.mubr.f32.mxu0 0.0
    %1513 = vmatmul.mubr.f32.gmra.mxu0 %v1444
    %v1514 = vpop.f32.mrf.mxu0
    %v1515 = vadd.f32 0.0, %v1514
    %v1516 = vpop.f32.mrf.mxu0
    %1517 = vdwg.mxu0
    %v1518 = vsel %vm129, %v1437, -inf
    %1519 = vmax.xlane.f32.xlu0 %v1518
    %v1520 = vpop.xlane.xlu0 %1519
    %v1521 = vsel %vm129, %v1515, -inf
    %1522 = vmax.xlane.f32.xlu0 %v1521
    %v1523 = vpop.xlane.xlu0 %1522
    %v1524 = vsub.f32 %v1437, %v1520
    %v1525 = vsub.f32 %v1515, %v1523
    %v1526 = vmul.f32 %v1524, 1.442695
    %v1527 = vpow.pop %v1526
    %v1528 = vmul.f32 %v1525, 1.442695
    %v1529 = vpow.pop %v1528
    %v1530 = vsel %vm129, %v1527, 0.0
    %1531 = vadd.xlane.f32.xlu0 %v1530
    %v1532 = vpop.xlane.xlu0 %1531
    %v1533 = vsel %vm129, %v1529, 0.0
    %1534 = vadd.xlane.f32.xlu0 %v1533
    %v1535 = vpop.xlane.xlu0 %1534
    %v1536 = vrcp.pop %v1532
    %v1537 = vmul.f32 %v1527, %v1536
    %v1538 = vrcp.pop %v1535
    %v1539 = vmul.f32 %v1529, %v1538
    %1540 = vrot.lane.b32.xlu0 %v112, 40
    %v1541 = vpop.permute.xlu0 %1540
    %v1544 = vsel %vm129, %v1537, 0
    %1546 = vmatprep.subr.mxu0 0.0
    %1547 = vmatpush1.msra.mxu0 0.0
    %1548 = vmatprep.subr.mxu0 0.0
    %1549 = vmatpush1.msra.mxu0 0.0
    %1550 = vmatprep.subr.mxu0 0.0
    %1551 = vmatpush1.msra.mxu0 0.0
    %1552 = vmatprep.subr.mxu0 0.0
    %1553 = vmatpush1.msra.mxu0 0.0
    %1554 = vmatprep.subr.mxu0 0.0
    %1555 = vmatpush1.msra.mxu0 0.0
    %1556 = vmatprep.subr.mxu0 0.0
    %1557 = vmatpush1.msra.mxu0 0.0
    %1558 = vmatprep.subr.mxu0 0.0
    %1559 = vmatpush1.msra.mxu0 0.0
    %1560 = vmatprep.subr.mxu0 0.0
    %1561 = vmatpush1.msra.mxu0 0.0
    %1562 = vmatprep.subr.mxu0 0.0
    %1563 = vmatpush1.msra.mxu0 0.0
    %1564 = vmatprep.subr.mxu0 0.0
    %1565 = vmatpush1.msra.mxu0 0.0
    %1566 = vmatprep.subr.mxu0 0.0
    %1567 = vmatpush1.msra.mxu0 0.0
    %1568 = vmatprep.subr.mxu0 0.0
    %1569 = vmatpush1.msra.mxu0 0.0
    %1570 = vmatprep.subr.mxu0 0.0
    %1571 = vmatpush1.msra.mxu0 0.0
    %1572 = vmatprep.subr.mxu0 0.0
    %1573 = vmatpush1.msra.mxu0 0.0
    %1574 = vmatprep.subr.mxu0 0.0
    %1575 = vmatpush1.msra.mxu0 0.0
    %1576 = vmatprep.subr.mxu0 0.0
    %1577 = vmatpush1.msra.mxu0 %v1541
    %1578 = vmatprep.subr.mxu0 0.0
    %1579 = vmatpush2.msra.mxu0 0.0
    %1580 = vmatprep.subr.mxu0 0.0
    %1581 = vmatpush2.msra.mxu0 0.0
    %1582 = vmatprep.subr.mxu0 0.0
    %1583 = vmatpush2.msra.mxu0 0.0
    %1584 = vmatprep.subr.mxu0 0.0
    %1585 = vmatpush2.msra.mxu0 0.0
    %1586 = vmatprep.subr.mxu0 0.0
    %1587 = vmatpush2.msra.mxu0 0.0
    %1588 = vmatprep.subr.mxu0 0.0
    %1589 = vmatpush2.msra.mxu0 0.0
    %1590 = vmatprep.subr.mxu0 0.0
    %1591 = vmatpush2.msra.mxu0 0.0
    %1592 = vmatprep.subr.mxu0 0.0
    %1593 = vmatpush2.msra.mxu0 0.0
    %1594 = vmatprep.subr.mxu0 0.0
    %1595 = vmatpush2.msra.mxu0 0.0
    %1596 = vmatprep.subr.mxu0 0.0
    %1597 = vmatpush2.msra.mxu0 0.0
    %1598 = vmatprep.subr.mxu0 0.0
    %1599 = vmatpush2.msra.mxu0 0.0
    %1600 = vmatprep.subr.mxu0 0.0
    %1601 = vmatpush2.msra.mxu0 0.0
    %1602 = vmatprep.subr.mxu0 0.0
    %1603 = vmatpush2.msra.mxu0 0.0
    %1604 = vmatprep.subr.mxu0 0.0
    %1605 = vmatpush2.msra.mxu0 0.0
    %1606 = vmatprep.subr.mxu0 0.0
    %1607 = vmatpush2.msra.mxu0 0.0
    %1608 = vmatprep.subr.mxu0 0.0
    %1609 = vmatpush2.msra.mxu0 0.0
    %1610 = vmatprep.mubr.f32.mxu0 0.0
    %1611 = vmatmul.mubr.f32.gmra.mxu0 %v1544
    %v1612 = vpop.f32.mrf.mxu0
    %v1613 = vadd.f32 0.0, %v1612
    %v1614 = vpop.f32.mrf.mxu0
    %1615 = vdwg.mxu0
    %1616 = vrot.lane.b32.xlu0 %v117, 40
    %v1617 = vpop.permute.xlu0 %1616
    %v1620 = vsel %vm129, %v1539, 0
    %1622 = vmatprep.subr.mxu0 0.0
    %1623 = vmatpush1.msra.mxu0 0.0
    %1624 = vmatprep.subr.mxu0 0.0
    %1625 = vmatpush1.msra.mxu0 0.0
    %1626 = vmatprep.subr.mxu0 0.0
    %1627 = vmatpush1.msra.mxu0 0.0
    %1628 = vmatprep.subr.mxu0 0.0
    %1629 = vmatpush1.msra.mxu0 0.0
    %1630 = vmatprep.subr.mxu0 0.0
    %1631 = vmatpush1.msra.mxu0 0.0
    %1632 = vmatprep.subr.mxu0 0.0
    %1633 = vmatpush1.msra.mxu0 0.0
    %1634 = vmatprep.subr.mxu0 0.0
    %1635 = vmatpush1.msra.mxu0 0.0
    %1636 = vmatprep.subr.mxu0 0.0
    %1637 = vmatpush1.msra.mxu0 0.0
    %1638 = vmatprep.subr.mxu0 0.0
    %1639 = vmatpush1.msra.mxu0 0.0
    %1640 = vmatprep.subr.mxu0 0.0
    %1641 = vmatpush1.msra.mxu0 0.0
    %1642 = vmatprep.subr.mxu0 0.0
    %1643 = vmatpush1.msra.mxu0 0.0
    %1644 = vmatprep.subr.mxu0 0.0
    %1645 = vmatpush1.msra.mxu0 0.0
    %1646 = vmatprep.subr.mxu0 0.0
    %1647 = vmatpush1.msra.mxu0 0.0
    %1648 = vmatprep.subr.mxu0 0.0
    %1649 = vmatpush1.msra.mxu0 0.0
    %1650 = vmatprep.subr.mxu0 0.0
    %1651 = vmatpush1.msra.mxu0 0.0
    %1652 = vmatprep.subr.mxu0 0.0
    %1653 = vmatpush1.msra.mxu0 %v1617
    %1654 = vmatprep.subr.mxu0 0.0
    %1655 = vmatpush2.msra.mxu0 0.0
    %1656 = vmatprep.subr.mxu0 0.0
    %1657 = vmatpush2.msra.mxu0 0.0
    %1658 = vmatprep.subr.mxu0 0.0
    %1659 = vmatpush2.msra.mxu0 0.0
    %1660 = vmatprep.subr.mxu0 0.0
    %1661 = vmatpush2.msra.mxu0 0.0
    %1662 = vmatprep.subr.mxu0 0.0
    %1663 = vmatpush2.msra.mxu0 0.0
    %1664 = vmatprep.subr.mxu0 0.0
    %1665 = vmatpush2.msra.mxu0 0.0
    %1666 = vmatprep.subr.mxu0 0.0
    %1667 = vmatpush2.msra.mxu0 0.0
    %1668 = vmatprep.subr.mxu0 0.0
    %1669 = vmatpush2.msra.mxu0 0.0
    %1670 = vmatprep.subr.mxu0 0.0
    %1671 = vmatpush2.msra.mxu0 0.0
    %1672 = vmatprep.subr.mxu0 0.0
    %1673 = vmatpush2.msra.mxu0 0.0
    %1674 = vmatprep.subr.mxu0 0.0
    %1675 = vmatpush2.msra.mxu0 0.0
    %1676 = vmatprep.subr.mxu0 0.0
    %1677 = vmatpush2.msra.mxu0 0.0
    %1678 = vmatprep.subr.mxu0 0.0
    %1679 = vmatpush2.msra.mxu0 0.0
    %1680 = vmatprep.subr.mxu0 0.0
    %1681 = vmatpush2.msra.mxu0 0.0
    %1682 = vmatprep.subr.mxu0 0.0
    %1683 = vmatpush2.msra.mxu0 0.0
    %1684 = vmatprep.subr.mxu0 0.0
    %1685 = vmatpush2.msra.mxu0 0.0
    %1686 = vmatprep.mubr.f32.mxu0 0.0
    %1687 = vmatmul.mubr.f32.gmra.mxu0 %v1620
    %v1688 = vpop.f32.mrf.mxu0
    %v1689 = vadd.f32 0.0, %v1688
    %v1690 = vpop.f32.mrf.mxu0
    %1691 = vdwg.mxu0
    %v1693 = vsel %vm129, %v1613, 0
    %v1696 = vsel %vm129, %v1689, 0
    %1698 = vmatprep.subr.mxu0 0.0
    %1699 = vmatpush1.msra.mxu0 0.0
    %1700 = vmatprep.subr.mxu0 0.0
    %1701 = vmatpush1.msra.mxu0 0.0
    %1702 = vmatprep.subr.mxu0 0.0
    %1703 = vmatpush1.msra.mxu0 0.0
    %1704 = vmatprep.subr.mxu0 0.0
    %1705 = vmatpush1.msra.mxu0 0.0
    %1706 = vmatprep.subr.mxu0 0.0
    %1707 = vmatpush1.msra.mxu0 0.0
    %1708 = vmatprep.subr.mxu0 0.0
    %1709 = vmatpush1.msra.mxu0 0.0
    %1710 = vmatprep.subr.mxu0 0.0
    %1711 = vmatpush1.msra.mxu0 0.0
    %1712 = vmatprep.subr.mxu0 0.0
    %1713 = vmatpush1.msra.mxu0 0.0
    %1714 = vmatprep.subr.mxu0 0.0
    %1715 = vmatpush1.msra.mxu0 0.0
    %1716 = vmatprep.subr.mxu0 0.0
    %1717 = vmatpush1.msra.mxu0 0.0
    %1718 = vmatprep.subr.mxu0 0.0
    %1719 = vmatpush1.msra.mxu0 0.0
    %1720 = vmatprep.subr.mxu0 0.0
    %1721 = vmatpush1.msra.mxu0 0.0
    %1722 = vmatprep.subr.mxu0 0.0
    %1723 = vmatpush1.msra.mxu0 0.0
    %1724 = vmatprep.subr.mxu0 0.0
    %1725 = vmatpush1.msra.mxu0 0.0
    %1726 = vmatprep.subr.mxu0 0.0
    %1727 = vmatpush1.msra.mxu0 0.0
    %1728 = vmatprep.subr.mxu0 0.0
    %1729 = vmatpush1.msra.mxu0 %v125
    %1730 = vmatprep.subr.mxu0 0.0
    %1731 = vmatpush2.msra.mxu0 0.0
    %1732 = vmatprep.subr.mxu0 0.0
    %1733 = vmatpush2.msra.mxu0 0.0
    %1734 = vmatprep.subr.mxu0 0.0
    %1735 = vmatpush2.msra.mxu0 0.0
    %1736 = vmatprep.subr.mxu0 0.0
    %1737 = vmatpush2.msra.mxu0 0.0
    %1738 = vmatprep.subr.mxu0 0.0
    %1739 = vmatpush2.msra.mxu0 0.0
    %1740 = vmatprep.subr.mxu0 0.0
    %1741 = vmatpush2.msra.mxu0 0.0
    %1742 = vmatprep.subr.mxu0 0.0
    %1743 = vmatpush2.msra.mxu0 0.0
    %1744 = vmatprep.subr.mxu0 0.0
    %1745 = vmatpush2.msra.mxu0 0.0
    %1746 = vmatprep.subr.mxu0 0.0
    %1747 = vmatpush2.msra.mxu0 0.0
    %1748 = vmatprep.subr.mxu0 0.0
    %1749 = vmatpush2.msra.mxu0 0.0
    %1750 = vmatprep.subr.mxu0 0.0
    %1751 = vmatpush2.msra.mxu0 0.0
    %1752 = vmatprep.subr.mxu0 0.0
    %1753 = vmatpush2.msra.mxu0 0.0
    %1754 = vmatprep.subr.mxu0 0.0
    %1755 = vmatpush2.msra.mxu0 0.0
    %1756 = vmatprep.subr.mxu0 0.0
    %1757 = vmatpush2.msra.mxu0 0.0
    %1758 = vmatprep.subr.mxu0 0.0
    %1759 = vmatpush2.msra.mxu0 0.0
    %1760 = vmatprep.subr.mxu0 0.0
    %1761 = vmatpush2.msra.mxu0 0.0
    %1762 = vmatprep.mubr.f32.mxu0 0.0
    %1763 = vmatmul.mubr.f32.gmra.mxu0 %v1693
    %v1764 = vpop.f32.mrf.mxu0
    %v1765 = vadd.f32 0.0, %v1764
    %v1766 = vpop.f32.mrf.mxu0
    %1767 = vmatprep.mubr.f32.mxu0 0.0
    %1768 = vmatmul.mubr.f32.gmra.mxu0 %v1696
    %v1769 = vpop.f32.mrf.mxu0
    %v1770 = vadd.f32 0.0, %v1769
    %v1771 = vpop.f32.mrf.mxu0
    %1772 = vdwg.mxu0
    %v1773 = vadd.f32 %v1360, %v1765
    %v1774 = vadd.f32 %v1361, %v1770
    %1775 = vst.msk [vmem:[#allocation4] sm:$0xff] %vm129, %v302
    %1776 = vst.msk [vmem:[#allocation4 + $0x8] sm:$0xff] %vm129, %v632
    %1777 = vst.msk [vmem:[#allocation4 + $0x10] sm:$0xff] %vm129, %v1124
    %1778 = vst.msk [vmem:[#allocation4 + $0x18] sm:$0xff] %vm129, %v1537
    %1779 = vst.msk [vmem:[#allocation4 + $0x20] sm:$0xff] %vm129, %v304
    %1780 = vst.msk [vmem:[#allocation4 + $0x28] sm:$0xff] %vm129, %v634
    %1781 = vst.msk [vmem:[#allocation4 + $0x30] sm:$0xff] %vm129, %v1126
    %1782 = vst.msk [vmem:[#allocation4 + $0x38] sm:$0xff] %vm129, %v1539
    %v1783 = vadd.f32 %v27, %v1773
    %v1784 = vadd.f32 %v28, %v1774
    %v1785 = vlaneseq
    %v1786 = vshrl.u32 %v1785, 7
    %v1787 = vsub.s32 1, %v1786
    %v1788 = vrot.slane %v29, %v1787
    %v1789 = vadd.f32 %v1783, %v1788
    %v1790 = vadd.f32 %v1784, %v1788
    %v1791 = vsel %vm38, %v1789, 0.0
    %1792 = vadd.xlane.f32.xlu0 %v1791
    %v1793 = vpop.xlane.xlu0 %1792
    %v1794 = vsel %vm38, %v1790, 0.0
    %1795 = vadd.xlane.f32.xlu0 %v1794
    %v1796 = vpop.xlane.xlu0 %1795
    %v1797 = vrcp.pop 32.0
    %v1798 = vmul.f32 %v1793, %v1797
    %v1799 = vmul.f32 %v1796, %v1797
    %v1800 = vsub.f32 %v1789, %v1798
    %v1801 = vsub.f32 %v1790, %v1799
    %v1802 = vmul.f32 %v1800, %v1800
    %v1803 = vmul.f32 %v1801, %v1801
    %v1804 = vsel %vm38, %v1802, 0.0
    %1805 = vadd.xlane.f32.xlu0 %v1804
    %v1806 = vpop.xlane.xlu0 %1805
    %v1807 = vsel %vm38, %v1803, 0.0
    %1808 = vadd.xlane.f32.xlu0 %v1807
    %v1809 = vpop.xlane.xlu0 %1808
    %v1810 = vmul.f32 %v1806, %v1797
    %v1811 = vmul.f32 %v1809, %v1797
    %v1812 = vadd.f32 %v1810, 1e-12
    %v1813 = vadd.f32 %v1811, 1e-12
    %v1814 = vrsqrt.pop %v1812
    %v1815 = vrsqrt.pop %v1813
    %v1816 = vmul.f32 %v1800, %v1814
    %v1817 = vmul.f32 %v1801, %v1815
    %v1818 = vlaneseq
    %v1819 = vshrl.u32 %v1818, 7
    %v1820 = vsub.s32 2, %v1819
    %v1821 = vrot.slane %v29, %v1820
    %v1822 = vmul.f32 %v1816, %v1821
    %v1823 = vmul.f32 %v1817, %v1821
    %v1824 = vlaneseq
    %v1825 = vshrl.u32 %v1824, 7
    %v1826 = vsub.s32 3, %v1825
    %v1827 = vrot.slane %v29, %v1826
    %v1828 = vadd.f32 %v1822, %v1827
    %v1829 = vadd.f32 %v1823, %v1827
    %v1830 = vld [vmem:[%s3] sm:$0xff]
    %v1831 = vld [vmem:[%s3 + $0x8] sm:$0xff]
    %v1832 = vld [vmem:[%s3 + $0x10] sm:$0xff]
    %v1833 = vld [vmem:[%s3 + $0x18] sm:$0xff]
    %v1834 = vlaneseq
    %v1835 = vshrl.u32 %v1834, 7
    %v1836 = vsub.s32 4, %v1835
    %v1837 = vrot.slane %v29, %v1836
    %v1839 = vsel %vm38, %v1828, 0
    %v1842 = vsel %vm38, %v1829, 0
    %1844 = vmatprep.subr.mxu0 0.0
    %1845 = vmatpush1.msra.mxu0 0.0
    %1846 = vmatprep.subr.mxu0 0.0
    %1847 = vmatpush1.msra.mxu0 0.0
    %1848 = vmatprep.subr.mxu0 0.0
    %1849 = vmatpush1.msra.mxu0 0.0
    %1850 = vmatprep.subr.mxu0 0.0
    %1851 = vmatpush1.msra.mxu0 0.0
    %1852 = vmatprep.subr.mxu0 0.0
    %1853 = vmatpush1.msra.mxu0 0.0
    %1854 = vmatprep.subr.mxu0 0.0
    %1855 = vmatpush1.msra.mxu0 0.0
    %1856 = vmatprep.subr.mxu0 0.0
    %1857 = vmatpush1.msra.mxu0 0.0
    %1858 = vmatprep.subr.mxu0 0.0
    %1859 = vmatpush1.msra.mxu0 0.0
    %1860 = vmatprep.subr.mxu0 0.0
    %1861 = vmatpush1.msra.mxu0 0.0
    %1862 = vmatprep.subr.mxu0 0.0
    %1863 = vmatpush1.msra.mxu0 0.0
    %1864 = vmatprep.subr.mxu0 0.0
    %1865 = vmatpush1.msra.mxu0 0.0
    %1866 = vmatprep.subr.mxu0 0.0
    %1867 = vmatpush1.msra.mxu0 0.0
    %1868 = vmatprep.subr.mxu0 0.0
    %1869 = vmatpush1.msra.mxu0 %v1833
    %1870 = vmatprep.subr.mxu0 0.0
    %1871 = vmatpush1.msra.mxu0 %v1832
    %1872 = vmatprep.subr.mxu0 0.0
    %1873 = vmatpush1.msra.mxu0 %v1831
    %1874 = vmatprep.subr.mxu0 0.0
    %1875 = vmatpush1.msra.mxu0 %v1830
    %1876 = vmatprep.subr.mxu0 0.0
    %1877 = vmatpush2.msra.mxu0 0.0
    %1878 = vmatprep.subr.mxu0 0.0
    %1879 = vmatpush2.msra.mxu0 0.0
    %1880 = vmatprep.subr.mxu0 0.0
    %1881 = vmatpush2.msra.mxu0 0.0
    %1882 = vmatprep.subr.mxu0 0.0
    %1883 = vmatpush2.msra.mxu0 0.0
    %1884 = vmatprep.subr.mxu0 0.0
    %1885 = vmatpush2.msra.mxu0 0.0
    %1886 = vmatprep.subr.mxu0 0.0
    %1887 = vmatpush2.msra.mxu0 0.0
    %1888 = vmatprep.subr.mxu0 0.0
    %1889 = vmatpush2.msra.mxu0 0.0
    %1890 = vmatprep.subr.mxu0 0.0
    %1891 = vmatpush2.msra.mxu0 0.0
    %1892 = vmatprep.subr.mxu0 0.0
    %1893 = vmatpush2.msra.mxu0 0.0
    %1894 = vmatprep.subr.mxu0 0.0
    %1895 = vmatpush2.msra.mxu0 0.0
    %1896 = vmatprep.subr.mxu0 0.0
    %1897 = vmatpush2.msra.mxu0 0.0
    %1898 = vmatprep.subr.mxu0 0.0
    %1899 = vmatpush2.msra.mxu0 0.0
    %1900 = vmatprep.subr.mxu0 0.0
    %1901 = vmatpush2.msra.mxu0 0.0
    %1902 = vmatprep.subr.mxu0 0.0
    %1903 = vmatpush2.msra.mxu0 0.0
    %1904 = vmatprep.subr.mxu0 0.0
    %1905 = vmatpush2.msra.mxu0 0.0
    %1906 = vmatprep.subr.mxu0 0.0
    %1907 = vmatpush2.msra.mxu0 0.0
    %1908 = vmatprep.mubr.f32.mxu0 0.0
    %1909 = vmatmul.mubr.f32.gmra.mxu0 %v1839
    %v1910 = vpop.f32.mrf.mxu0
    %v1911 = vadd.f32 %v1837, %v1910
    %v1912 = vpop.f32.mrf.mxu0
    %1913 = vmatprep.mubr.f32.mxu0 0.0
    %1914 = vmatmul.mubr.f32.gmra.mxu0 %v1842
    %v1915 = vpop.f32.mrf.mxu0
    %v1916 = vadd.f32 %v1837, %v1915
    %v1917 = vpop.f32.mrf.mxu0
    %1918 = vdwg.mxu0
    %v1919 = vmul.f32 %v1911, 0.5
    %v1920 = vmul.f32 %v1916, 0.5
    %v1921 = vmul.f32 %v1911, 0.044715
    %v1922 = vmul.f32 %v1916, 0.044715
    %v1923 = vmul.f32 %v1921, %v1911
    %v1924 = vmul.f32 %v1922, %v1916
    %v1925 = vmul.f32 %v1923, %v1911
    %v1926 = vmul.f32 %v1924, %v1916
    %v1927 = vadd.f32 %v1911, %v1925
    %v1928 = vadd.f32 %v1916, %v1926
    %v1929 = vmul.f32 %v1927, 0.7978846
    %v1930 = vmul.f32 %v1928, 0.7978846
    %v1931 = vtanh.pop %v1929
    %v1932 = vtanh.pop %v1930
    %v1933 = vadd.f32 %v1931, 1.0
    %v1934 = vadd.f32 %v1932, 1.0
    %v1935 = vmul.f32 %v1919, %v1933
    %v1936 = vmul.f32 %v1920, %v1934
    %v1937 = vld [vmem:[%s4] sm:$0xff]
    %v1938 = vld [vmem:[%s4 + $0x8] sm:$0xff]
    %v1939 = vld [vmem:[%s4 + $0x10] sm:$0xff]
    %v1940 = vld [vmem:[%s4 + $0x18] sm:$0xff]
    %v1941 = vld [vmem:[%s4 + $0x20] sm:$0xff]
    %v1942 = vld [vmem:[%s4 + $0x28] sm:$0xff]
    %v1943 = vld [vmem:[%s4 + $0x30] sm:$0xff]
    %v1944 = vld [vmem:[%s4 + $0x38] sm:$0xff]
    %v1945 = vlaneseq
    %v1946 = vshrl.u32 %v1945, 7
    %v1947 = vsub.s32 5, %v1946
    %v1948 = vrot.slane %v29, %v1947
    %vm1949 = vcmask 523264
    %v1951 = vsel %vm1949, %v1935, 0
    %v1954 = vsel %vm1949, %v1936, 0
    %1956 = vmatprep.subr.mxu0 0.0
    %1957 = vmatpush1.msra.mxu0 0.0
    %1958 = vmatprep.subr.mxu0 0.0
    %1959 = vmatpush1.msra.mxu0 0.0
    %1960 = vmatprep.subr.mxu0 0.0
    %1961 = vmatpush1.msra.mxu0 0.0
    %1962 = vmatprep.subr.mxu0 0.0
    %1963 = vmatpush1.msra.mxu0 0.0
    %1964 = vmatprep.subr.mxu0 0.0
    %1965 = vmatpush1.msra.mxu0 0.0
    %1966 = vmatprep.subr.mxu0 0.0
    %1967 = vmatpush1.msra.mxu0 0.0
    %1968 = vmatprep.subr.mxu0 0.0
    %1969 = vmatpush1.msra.mxu0 0.0
    %1970 = vmatprep.subr.mxu0 0.0
    %1971 = vmatpush1.msra.mxu0 0.0
    %1972 = vmatprep.subr.mxu0 0.0
    %1973 = vmatpush1.msra.mxu0 %v1944
    %1974 = vmatprep.subr.mxu0 0.0
    %1975 = vmatpush1.msra.mxu0 %v1943
    %1976 = vmatprep.subr.mxu0 0.0
    %1977 = vmatpush1.msra.mxu0 %v1942
    %1978 = vmatprep.subr.mxu0 0.0
    %1979 = vmatpush1.msra.mxu0 %v1941
    %1980 = vmatprep.subr.mxu0 0.0
    %1981 = vmatpush1.msra.mxu0 %v1940
    %1982 = vmatprep.subr.mxu0 0.0
    %1983 = vmatpush1.msra.mxu0 %v1939
    %1984 = vmatprep.subr.mxu0 0.0
    %1985 = vmatpush1.msra.mxu0 %v1938
    %1986 = vmatprep.subr.mxu0 0.0
    %1987 = vmatpush1.msra.mxu0 %v1937
    %1988 = vmatprep.subr.mxu0 0.0
    %1989 = vmatpush2.msra.mxu0 0.0
    %1990 = vmatprep.subr.mxu0 0.0
    %1991 = vmatpush2.msra.mxu0 0.0
    %1992 = vmatprep.subr.mxu0 0.0
    %1993 = vmatpush2.msra.mxu0 0.0
    %1994 = vmatprep.subr.mxu0 0.0
    %1995 = vmatpush2.msra.mxu0 0.0
    %1996 = vmatprep.subr.mxu0 0.0
    %1997 = vmatpush2.msra.mxu0 0.0
    %1998 = vmatprep.subr.mxu0 0.0
    %1999 = vmatpush2.msra.mxu0 0.0
    %2000 = vmatprep.subr.mxu0 0.0
    %2001 = vmatpush2.msra.mxu0 0.0
    %2002 = vmatprep.subr.mxu0 0.0
    %2003 = vmatpush2.msra.mxu0 0.0
    %2004 = vmatprep.subr.mxu0 0.0
    %2005 = vmatpush2.msra.mxu0 0.0
    %2006 = vmatprep.subr.mxu0 0.0
    %2007 = vmatpush2.msra.mxu0 0.0
    %2008 = vmatprep.subr.mxu0 0.0
    %2009 = vmatpush2.msra.mxu0 0.0
    %2010 = vmatprep.subr.mxu0 0.0
    %2011 = vmatpush2.msra.mxu0 0.0
    %2012 = vmatprep.subr.mxu0 0.0
    %2013 = vmatpush2.msra.mxu0 0.0
    %2014 = vmatprep.subr.mxu0 0.0
    %2015 = vmatpush2.msra.mxu0 0.0
    %2016 = vmatprep.subr.mxu0 0.0
    %2017 = vmatpush2.msra.mxu0 0.0
    %2018 = vmatprep.subr.mxu0 0.0
    %2019 = vmatpush2.msra.mxu0 0.0
    %2020 = vmatprep.mubr.f32.mxu0 0.0
    %2021 = vmatmul.mubr.f32.gmra.mxu0 %v1951
    %v2022 = vpop.f32.mrf.mxu0
    %v2023 = vadd.f32 %v1948, %v2022
    %v2024 = vpop.f32.mrf.mxu0
    %2025 = vmatprep.mubr.f32.mxu0 0.0
    %2026 = vmatmul.mubr.f32.gmra.mxu0 %v1954
    %v2027 = vpop.f32.mrf.mxu0
    %v2028 = vadd.f32 %v1948, %v2027
    %v2029 = vpop.f32.mrf.mxu0
    %2030 = vdwg.mxu0
    %v2031 = vadd.f32 %v2023, %v1828
    %v2032 = vadd.f32 %v2028, %v1829
    %v2033 = vsel %vm38, %v2031, 0.0
    %2034 = vadd.xlane.f32.xlu0 %v2033
    %v2035 = vpop.xlane.xlu0 %2034
    %v2036 = vsel %vm38, %v2032, 0.0
    %2037 = vadd.xlane.f32.xlu0 %v2036
    %v2038 = vpop.xlane.xlu0 %2037
    %v2039 = vmul.f32 %v2035, %v1797
    %v2040 = vmul.f32 %v2038, %v1797
    %v2041 = vsub.f32 %v2031, %v2039
    %v2042 = vsub.f32 %v2032, %v2040
    %v2043 = vmul.f32 %v2041, %v2041
    %v2044 = vmul.f32 %v2042, %v2042
    %v2045 = vsel %vm38, %v2043, 0.0
    %2046 = vadd.xlane.f32.xlu0 %v2045
    %v2047 = vpop.xlane.xlu0 %2046
    %v2048 = vsel %vm38, %v2044, 0.0
    %2049 = vadd.xlane.f32.xlu0 %v2048
    %v2050 = vpop.xlane.xlu0 %2049
    %v2051 = vmul.f32 %v2047, %v1797
    %v2052 = vmul.f32 %v2050, %v1797
    %v2053 = vadd.f32 %v2051, 1e-12
    %v2054 = vadd.f32 %v2052, 1e-12
    %v2055 = vrsqrt.pop %v2053
    %v2056 = vrsqrt.pop %v2054
    %v2057 = vmul.f32 %v2041, %v2055
    %v2058 = vmul.f32 %v2042, %v2056
    %v2059 = vlaneseq
    %v2060 = vshrl.u32 %v2059, 7
    %v2061 = vsub.s32 6, %v2060
    %v2062 = vrot.slane %v29, %v2061
    %v2063 = vmul.f32 %v2057, %v2062
    %v2064 = vmul.f32 %v2058, %v2062
    %v2065 = vlaneseq
    %v2066 = vshrl.u32 %v2065, 7
    %v2067 = vsub.s32 7, %v2066
    %v2068 = vrot.slane %v29, %v2067
    %v2069 = vadd.f32 %v2063, %v2068
    %v2070 = vadd.f32 %v2064, %v2068
    %2071 = vst.msk [vmem:[#allocation2] sm:$0xff] %vm38, %v2069
    %2072 = vst.msk [vmem:[#allocation2 + $0x8] sm:$0xff] %vm38, %v2070
    // Predicated region
    $region26: #{albert_layer.1} parent=1 // pred_check
      _
    $region27: #{albert_layer.1} parent=1 // pred_check_branch
      %2074 = sbr.rel (0) target = $region29
    $region28: #{albert_layer.1} parent=1 // pred_region
      %s2076 = ssub.s32 256, 256
      %2077 = vsyncadd [#allocation3], %s2076
      %s2078 = sshll.u32 [#allocation2], 4
      %s2079 = int_to_ptr.vmem [resolvable:$true] %s2078
      %2084 = dma.vmem_to_hbm [thread:$0]  %s2079, 256, %s6, [#allocation3], 128, 128, 8
    $region29: #{albert_layer.1} parent=1 // pred_fallthru
      _
    // Predicated region
    $region30: #{albert_layer.1} parent=1 // pred_check
      _
    $region31: #{albert_layer.1} parent=1 // pred_check_branch
      %2086 = sbr.rel (0) target = $region33
    $region32: #{albert_layer.1} parent=1 // pred_region
      %s2088 = ssub.s32 1024, 1024
      %2089 = vsyncadd [#allocation5], %s2088
      %s2090 = sshll.u32 [#allocation4], 4
      %s2091 = int_to_ptr.vmem [resolvable:$true] %s2090
      %2096 = dma.vmem_to_hbm [thread:$0]  %s2091, 1024, %s7, [#allocation5], 128, 128, 8
    $region33: #{albert_layer.1} parent=1 // pred_fallthru
      _
    // Predicated region
    $region34: #{albert_layer.1} parent=1 // pred_check
      _
    $region35: #{albert_layer.1} parent=1 // pred_check_branch
      %2098 = sbr.rel (0) target = $region37
    $region36: #{albert_layer.1} parent=1 // pred_region
      %2099 = dma.done [#allocation3], 256
    $region37: #{albert_layer.1} parent=1 // pred_fallthru
      _
    // Predicated region
    $region38: #{albert_layer.1} parent=1 // pred_check
      _
    $region39: #{albert_layer.1} parent=1 // pred_check_branch
      %2101 = sbr.rel (0) target = $region41
    $region40: #{albert_layer.1} parent=1 // pred_region
      %2102 = dma.done [#allocation5], 1024
    $region41: #{albert_layer.1} parent=1 // pred_fallthru
      _
    %2103 = vsyncpa [#allocation3], 1
    %2104 = vsyncpa [#allocation5], 1

</llo_original>
